<compile_context>
chip_gen: v5e
topology: v5e:2x2
jax: 0.10.0
libtpu: 0.0.40
codegen_flags: <defaults>
</compile_context>

<pallas_src>
import functools

import numpy as np
import jax
import jax.numpy as jnp
from jax import lax
from jax.experimental import pallas as pl
from jax.experimental.pallas import tpu as pltpu


# ----------------------------- static planning (host) -----------------------------

def _layer_geometry(P_in, H_in, W_in, C_in, C_out, K, s, p, op):
    """Static geometry of one ConvTranspose2d layer under the phase-major polyphase
    decomposition (input arrives as P_in row-phase planes)."""
    # TODO(synk): fall back to a dilation-based / per-layer kernel when these
    # polyphase assumptions (K % s == 0, Hq % P_in == 0, ...) do not hold.
    assert K % s == 0
    Th = Tw = K // s
    Ho = (H_in - 1) * s - 2 * p + K + op
    Wo = (W_in - 1) * s - 2 * p + K + op
    assert Ho % s == 0 and Wo % s == 0
    Hq, Wq = Ho // s, Wo // s
    assert H_in % P_in == 0 and Hq % P_in == 0
    Hp_in = H_in // P_in            # rows per input phase plane
    M = Hq // P_in                  # rows per output phase plane (matmul M dim)
    P_out = P_in * s
    dh = tuple((r + p) // s for r in range(s))
    dw = tuple((r + p) // s for r in range(s))

    # Source (plane, row-offset) for each (output phase phi = s*e + r, row tap t).
    betas = {}
    for e in range(P_in):
        for r in range(s):
            for t in range(Th):
                c = e + dh[r] - t
                betas[(e, r, t)] = (c % P_in, c // P_in)      # (plane, beta)
    bmin = min(b for _, b in betas.values())
    bmax = max(b for _, b in betas.values())
    Lh = max(0, -bmin)                                        # top zero halo rows
    Rh = max(0, bmax + M - Hp_in)                             # bottom zero halo rows
    src = tuple(
        tuple((betas[(phi // s, phi % s, t)][0],
               Lh + betas[(phi // s, phi % s, t)][1]) for t in range(Th))
        for phi in range(P_out))

    return dict(P_in=P_in, P_out=P_out, s=s, p=p, Th=Th, Tw=Tw,
                H_in=H_in, W_in=W_in, C_in=C_in, C_out=C_out,
                Ho=Ho, Wo=Wo, Hq=Hq, Wq=Wq, Hp_in=Hp_in, M=M,
                Lh=Lh, Rh=Rh, Hp_pad=Lh + Hp_in + Rh,
                Win=W_in * C_in, Lout=Wq * s * C_out,
                dh=dh, dw=dw, src=src)


def build_plan(input_shape_nchw, params, *, stride, padding, output_padding):
    """Static network plan (per-layer geometry) for the fused kernel."""
    N, C0, H0, W0 = input_shape_nchw
    geos = []
    P_in, H_in, W_in, C_in = 1, H0, W0, C0
    for (w, _b) in params:
        c_in, c_out, KH, KW = w.shape            # PyTorch ConvTranspose2d layout
        assert c_in == C_in and KH == KW
        geo = _layer_geometry(P_in, H_in, W_in, C_in, c_out, KH,
                              stride, padding, output_padding)
        geos.append(geo)
        P_in, H_in, W_in, C_in = geo["P_out"], geo["Ho"], geo["Wo"], geo["C_out"]
    return dict(N=N, C0=C0, H0=H0, W0=W0, geos=tuple(geos))


def _pack_layer_params(geo, w_np, b_np):
    """Block-banded weight (s, Th, W_in*C_in, Wq*s*C_out) and tiled bias row.
    Column halos are folded in: taps that would read outside [0, W_in) are zero."""
    s, p, Th, Tw = geo["s"], geo["p"], geo["Th"], geo["Tw"]
    W_in, C_in, C_out, Wq = geo["W_in"], geo["C_in"], geo["C_out"], geo["Wq"]
    Wm = np.zeros((s, Th, geo["Win"], geo["Lout"]), np.float32)
    for r in range(s):                                   # row phase
        for t in range(Th):                              # row tap
            kh = (r + p) % s + s * t
            for rw in range(s):                          # column phase
                dwr = geo["dw"][rw]
                for tw in range(Tw):                     # column tap
                    kw = (rw + p) % s + s * tw
                    blk = w_np[:, :, kh, kw]             # (C_in, C_out)
                    for qw in range(Wq):
                        v = qw + dwr - tw                # source input column
                        if 0 <= v < W_in:
                            Wm[r, t, v * C_in:(v + 1) * C_in,
                               (qw * s + rw) * C_out:(qw * s + rw + 1) * C_out] = blk
    b_row = np.tile(np.asarray(b_np, np.float32), Wq * s).reshape(1, geo["Lout"])
    return (jnp.asarray(Wm, jnp.bfloat16), jnp.asarray(b_row, jnp.float32))


def pack_params(plan, params):
    """Pack per-layer (w, b) into MXU-ready banded weights + bias rows (host side,
    once per parameter set -> never rebuilt inside the jitted forward)."""
    packed = []
    for geo, (w, b) in zip(plan["geos"], params):
        packed.append(_pack_layer_params(geo,
                                         np.asarray(jax.device_get(w), np.float32),
                                         np.asarray(jax.device_get(b), np.float32)))
    return packed


# --------------------------------- fused kernel ----------------------------------

def _fused_convT_kernel(*refs, geos):
    """One image per grid step.
    refs = (x, w0, b0, ..., w(L-1), b(L-1), out, scratch0, ..., scratch(L-1))."""
    L = len(geos)
    x_ref = refs[0]
    w_refs = [refs[1 + 2 * l] for l in range(L)]
    b_refs = [refs[2 + 2 * l] for l in range(L)]
    o_ref = refs[1 + 2 * L]
    scratch = list(refs[2 + 2 * L:])

    # Stage the un-padded input into layer 0's zero-haloed phase plane (halo handled
    # in-kernel; no jnp.pad / extra HBM pass in the wrapper).
    g0 = geos[0]
    s0 = scratch[0]
    s0[...] = jnp.zeros(s0.shape, s0.dtype)
    s0[0, g0["Lh"]:g0["Lh"] + g0["Hp_in"], :] = x_ref[0].astype(s0.dtype)

    for l, g in enumerate(geos):
        X = scratch[l]
        last = (l + 1 == L)
        if not last:
            Y = scratch[l + 1]
            Y[...] = jnp.zeros(Y.shape, Y.dtype)
            lh_next = geos[l + 1]["Lh"]
        # Hoisted bias broadcast (added once per phase as the accumulator init).
        bias = jnp.broadcast_to(b_refs[l][...].astype(jnp.float32),
                                (g["M"], g["Lout"]))
        for phi in range(g["P_out"]):                   # output row phase
            r = phi % g["s"]
            acc = bias
            for t in range(g["Th"]):                    # row taps: deep banded matmuls
                rho, start = g["src"][phi][t]
                acc = acc + jnp.dot(X[rho, start:start + g["M"], :],
                                    w_refs[l][r, t],
                                    preferred_element_type=jnp.float32)
            out = jnp.maximum(acc, 0.0)                 # ReLU (norm=None, drop=0 -> id)
            if last:
                o_ref[0, phi, :, :] = out.astype(o_ref.dtype)
            else:
                Y[phi, lh_next:lh_next + g["M"], :] = out.astype(Y.dtype)


def conv_transpose_neural_network(x_nchw, packed, *, plan):
    """Forward pass of the whole module (NCHW in / NCHW out), fused in one kernel."""
    geos = plan["geos"]
    gL = geos[-1]
    N, C0, H0, W0 = x_nchw.shape
    assert (C0, H0, W0) == (plan["C0"], plan["H0"], plan["W0"])

    # NCHW -> lane-flat NHWC, bf16 (single fused XLA op).
    x = jnp.transpose(x_nchw, (0, 2, 3, 1)).reshape(N, H0, W0 * C0)
    x = x.astype(jnp.bfloat16)

    flat = []
    for wm, br in packed:
        flat += [wm, br]

    in_specs = [pl.BlockSpec((1, H0, W0 * C0), lambda n: (n, 0, 0))]
    for wm, br in packed:
        in_specs.append(pl.BlockSpec(wm.shape, lambda n: (0, 0, 0, 0)))
        in_specs.append(pl.BlockSpec(br.shape, lambda n: (0, 0)))

    # TODO(synk): for activations that outgrow VMEM (v7x: 64 MiB), add an Hq row-tile
    # grid axis with halo instead of whole-image blocks.
    out = pl.pallas_call(
        functools.partial(_fused_convT_kernel, geos=geos),
        out_shape=jax.ShapeDtypeStruct((N, gL["P_out"], gL["M"], gL["Lout"]),
                                       jnp.float32),
        grid=(N,),
        in_specs=in_specs,
        out_specs=pl.BlockSpec((1, gL["P_out"], gL["M"], gL["Lout"]),
                               lambda n: (n, 0, 0, 0)),
        scratch_shapes=[pltpu.VMEM((g["P_in"], g["Hp_pad"], g["Win"]), jnp.bfloat16)
                        for g in geos],
        compiler_params=pltpu.CompilerParams(dimension_semantics=("parallel",)),
    )(x, *flat)

    # (N, phase, m, Wo*C) with output row h = P*m + phase: the row pixel shuffle folds
    # into the (anyway required) NHWC->NCHW conversion -> a single XLA transpose.
    P, M, Wo, C = gL["P_out"], gL["M"], gL["Wo"], gL["C_out"]
    y = out.reshape(N, P, M, Wo, C).transpose(0, 4, 2, 1, 3)
    return y.reshape(N, C, P * M, Wo)


# ----------------------------------- reference ------------------------------------

def _ref_layer(x_nchw, w_pt, b, *, stride, padding, output_padding):
    """Pure-JAX (XLA) reference: ConvTranspose2d + ReLU via lhs_dilation."""
    _, _, KH, KW = w_pt.shape
    s, p, op = stride, padding, output_padding
    w = jnp.flip(w_pt, axis=(2, 3)).transpose(2, 3, 0, 1)      # HWIO
    x = jnp.transpose(x_nchw, (0, 2, 3, 1))
    out = lax.conv_general_dilated(
        x, w, window_strides=(1, 1),
        padding=[(KH - 1 - p, KH - 1 - p + op), (KW - 1 - p, KW - 1 - p + op)],
        lhs_dilation=(s, s),
        dimension_numbers=("NHWC", "HWIO", "NHWC"),
        precision=lax.Precision.HIGHEST)
    out = jax.nn.relu(out + b)
    return jnp.transpose(out, (0, 3, 1, 2))


# -------------------------------------- main ---------------------------------------

if __name__ == "__main__":
    # Module config: dim_input=4, dim_layers=[8, 4], kernel_size=4, strides=2,
    # padding=1, output_padding=0, norm=None, act_fun='ReLU', drop_rate=0.0
    dim_input = 4
    dim_layers = [8, 4]
    K, S, P, OP = 4, 2, 1, 0

    key = jax.random.PRNGKey(0)
    kx, *kws = jax.random.split(key, 1 + 2 * len(dim_layers))

    N, H, W = 2, 16, 16
    x = jax.random.normal(kx, (N, dim_input, H, W), dtype=jnp.float32)

    # Deterministic parameter init (PyTorch-like uniform(-bound, bound)).
    params = []
    cin = dim_input
    for li, cout in enumerate(dim_layers):
        bound = 1.0 / float(np.sqrt(cin * K * K))
        w = jax.random.uniform(kws[2 * li], (cin, cout, K, K),
                               minval=-bound, maxval=bound, dtype=jnp.float32)
        b = jax.random.uniform(kws[2 * li + 1], (cout,),
                               minval=-bound, maxval=bound, dtype=jnp.float32)
        params.append((w, b))
        cin = cout

    # Host-side, once per parameter set: static plan + packed banded weights.
    plan = build_plan(x.shape, params, stride=S, padding=P, output_padding=OP)
    packed = pack_params(plan, params)

    fwd = jax.jit(functools.partial(conv_transpose_neural_network, plan=plan))
    out = jax.block_until_ready(fwd(x, packed))

    # Cross-check against an XLA reference of the same math (f32, HIGHEST).
    ref = x
    for (w, b) in params:
        ref = _ref_layer(ref, w, b, stride=S, padding=P, output_padding=OP)
    ref = jax.block_until_ready(ref)

    assert out.shape == (N, dim_layers[-1], H * 4, W * 4), out.shape
    # bf16 operands in the kernel vs f32 reference -> loosened tolerance.
    max_err = float(jnp.max(jnp.abs(out - ref)))
    assert jnp.allclose(out, ref, atol=3e-2, rtol=3e-2), max_err

    print("KERNEL_OK")
</pallas_src>

<mosaic_0001>
module attributes {stable_mosaic.version = 11 : i64} {
  func.func @_fused_convT_kernel(%arg0: i32, %arg1: memref<1x16x64xbf16, #tpu.memory_space<vmem>>, %arg2: memref<2x2x64x256xbf16, #tpu.memory_space<vmem>>, %arg3: memref<1x256xf32, #tpu.memory_space<vmem>>, %arg4: memref<2x2x256x256xbf16, #tpu.memory_space<vmem>>, %arg5: memref<1x256xf32, #tpu.memory_space<vmem>>, %arg6: memref<1x4x16x256xf32, #tpu.memory_space<vmem>>, %arg7: memref<1x18x64xbf16, #tpu.memory_space<vmem>>, %arg8: memref<2x18x256xbf16, #tpu.memory_space<vmem>>) attributes {dimension_semantics = [#tpu.dimension_semantics<parallel>], iteration_bounds = array<i64: 2>, scalar_prefetch = 0 : i64, scratch_operands = 2 : i64, tpu.core_type = #tpu.core_type<tc>, window_params = [{transform_indices = @transform_0, window_bounds = array<i64: 1, 16, 64>}, {pipeline_mode = #tpu.pipeline_mode<synchronous>, transform_indices = @transform_1, window_bounds = array<i64: 2, 2, 64, 256>}, {pipeline_mode = #tpu.pipeline_mode<synchronous>, transform_indices = @transform_2, window_bounds = array<i64: 1, 256>}, {pipeline_mode = #tpu.pipeline_mode<synchronous>, transform_indices = @transform_3, window_bounds = array<i64: 2, 2, 256, 256>}, {pipeline_mode = #tpu.pipeline_mode<synchronous>, transform_indices = @transform_4, window_bounds = array<i64: 1, 256>}, {transform_indices = @transform_5, window_bounds = array<i64: 1, 4, 16, 256>}]} {
    %cst = arith.constant 0.000000e+00 : bf16
    %0 = vector.broadcast %cst : bf16 to vector<1x18x64xbf16>
    %c0 = arith.constant 0 : index
    %c0_0 = arith.constant 0 : index
    %c0_1 = arith.constant 0 : index
    %1 = vector.load %arg7[%c0, %c0_0, %c0_1] : memref<1x18x64xbf16, #tpu.memory_space<vmem>>, vector<1x18x64xbf16>
    tpu.vector_store %arg7[%c0, %c0_0, %c0_1], %0 {strides = array<i32>} : memref<1x18x64xbf16, #tpu.memory_space<vmem>>, vector<1x18x64xbf16>,
    %c0_2 = arith.constant 0 : index
    %c0_3 = arith.constant 0 : index
    %c0_4 = arith.constant 0 : index
    %2 = vector.load %arg1[%c0_2, %c0_3, %c0_4] : memref<1x16x64xbf16, #tpu.memory_space<vmem>>, vector<1x16x64xbf16>
    %3 = vector.shape_cast %2 : vector<1x16x64xbf16> to vector<16x64xbf16>
    %c0_5 = arith.constant 0 : index
    %c1 = arith.constant 1 : index
    %c0_6 = arith.constant 0 : index
    %4 = vector.load %arg7[%c0_5, %c1, %c0_6] : memref<1x18x64xbf16, #tpu.memory_space<vmem>>, vector<1x16x64xbf16>
    %5 = vector.shape_cast %4 : vector<1x16x64xbf16> to vector<16x64xbf16>
    %6 = vector.shape_cast %3 : vector<16x64xbf16> to vector<1x16x64xbf16>
    tpu.vector_store %arg7[%c0_5, %c1, %c0_6], %6 {strides = array<i32>} : memref<1x18x64xbf16, #tpu.memory_space<vmem>>, vector<1x16x64xbf16>,
    %cst_7 = arith.constant 0.000000e+00 : bf16
    %7 = vector.broadcast %cst_7 : bf16 to vector<2x18x256xbf16>
    %c0_8 = arith.constant 0 : index
    %c0_9 = arith.constant 0 : index
    %c0_10 = arith.constant 0 : index
    %8 = vector.load %arg8[%c0_8, %c0_9, %c0_10] : memref<2x18x256xbf16, #tpu.memory_space<vmem>>, vector<2x18x256xbf16>
    tpu.vector_store %arg8[%c0_8, %c0_9, %c0_10], %7 {strides = array<i32>} : memref<2x18x256xbf16, #tpu.memory_space<vmem>>, vector<2x18x256xbf16>,
    %c0_11 = arith.constant 0 : index
    %c0_12 = arith.constant 0 : index
    %9 = vector.load %arg3[%c0_11, %c0_12] : memref<1x256xf32, #tpu.memory_space<vmem>>, vector<1x256xf32>
    %10 = vector.shape_cast %9 : vector<1x256xf32> to vector<1x256xf32>
    %11 = vector.broadcast %10 : vector<1x256xf32> to vector<16x256xf32>
    %c0_13 = arith.constant 0 : index
    %c1_14 = arith.constant 1 : index
    %c0_15 = arith.constant 0 : index
    %12 = vector.load %arg7[%c0_13, %c1_14, %c0_15] : memref<1x18x64xbf16, #tpu.memory_space<vmem>>, vector<1x16x64xbf16>
    %13 = vector.shape_cast %12 : vector<1x16x64xbf16> to vector<16x64xbf16>
    %c0_16 = arith.constant 0 : index
    %c0_17 = arith.constant 0 : index
    %c0_18 = arith.constant 0 : index
    %c0_19 = arith.constant 0 : index
    %14 = vector.load %arg2[%c0_16, %c0_17, %c0_18, %c0_19] : memref<2x2x64x256xbf16, #tpu.memory_space<vmem>>, vector<1x1x64x256xbf16>
    %15 = vector.shape_cast %14 : vector<1x1x64x256xbf16> to vector<64x256xbf16>
    %cst_20 = arith.constant dense<0.000000e+00> : vector<16x256xf32>
    %16 = tpu.matmul %13, %15, %cst_20 {dimension_numbers = #tpu.dot_dimension_numbers<[1], [0], [0], [1], [0, 0, 1, 1], [], []>} : vector<16x64xbf16>, vector<64x256xbf16>, vector<16x256xf32> -> vector<16x256xf32>
    %17 = arith.addf %11, %16 : vector<16x256xf32>
    %c0_21 = arith.constant 0 : index
    %c0_22 = arith.constant 0 : index
    %c0_23 = arith.constant 0 : index
    %18 = vector.load %arg7[%c0_21, %c0_22, %c0_23] : memref<1x18x64xbf16, #tpu.memory_space<vmem>>, vector<1x16x64xbf16>
    %19 = vector.shape_cast %18 : vector<1x16x64xbf16> to vector<16x64xbf16>
    %c0_24 = arith.constant 0 : index
    %c1_25 = arith.constant 1 : index
    %c0_26 = arith.constant 0 : index
    %c0_27 = arith.constant 0 : index
    %20 = vector.load %arg2[%c0_24, %c1_25, %c0_26, %c0_27] : memref<2x2x64x256xbf16, #tpu.memory_space<vmem>>, vector<1x1x64x256xbf16>
    %21 = vector.shape_cast %20 : vector<1x1x64x256xbf16> to vector<64x256xbf16>
    %cst_28 = arith.constant dense<0.000000e+00> : vector<16x256xf32>
    %22 = tpu.matmul %19, %21, %cst_28 {dimension_numbers = #tpu.dot_dimension_numbers<[1], [0], [0], [1], [0, 0, 1, 1], [], []>} : vector<16x64xbf16>, vector<64x256xbf16>, vector<16x256xf32> -> vector<16x256xf32>
    %23 = arith.addf %17, %22 : vector<16x256xf32>
    %cst_29 = arith.constant 0.000000e+00 : f32
    %24 = vector.broadcast %cst_29 : f32 to vector<16x256xf32>
    %25 = arith.maximumf %23, %24 : vector<16x256xf32>
    %26 = arith.truncf %25 : vector<16x256xf32> to vector<16x256xbf16>
    %c0_30 = arith.constant 0 : index
    %c1_31 = arith.constant 1 : index
    %c0_32 = arith.constant 0 : index
    %27 = vector.load %arg8[%c0_30, %c1_31, %c0_32] : memref<2x18x256xbf16, #tpu.memory_space<vmem>>, vector<1x16x256xbf16>
    %28 = vector.shape_cast %27 : vector<1x16x256xbf16> to vector<16x256xbf16>
    %29 = vector.shape_cast %26 : vector<16x256xbf16> to vector<1x16x256xbf16>
    tpu.vector_store %arg8[%c0_30, %c1_31, %c0_32], %29 {strides = array<i32>} : memref<2x18x256xbf16, #tpu.memory_space<vmem>>, vector<1x16x256xbf16>,
    %c0_33 = arith.constant 0 : index
    %c2 = arith.constant 2 : index
    %c0_34 = arith.constant 0 : index
    %30 = vector.load %arg7[%c0_33, %c2, %c0_34] : memref<1x18x64xbf16, #tpu.memory_space<vmem>>, vector<1x16x64xbf16>
    %31 = vector.shape_cast %30 : vector<1x16x64xbf16> to vector<16x64xbf16>
    %c1_35 = arith.constant 1 : index
    %c0_36 = arith.constant 0 : index
    %c0_37 = arith.constant 0 : index
    %c0_38 = arith.constant 0 : index
    %32 = vector.load %arg2[%c1_35, %c0_36, %c0_37, %c0_38] : memref<2x2x64x256xbf16, #tpu.memory_space<vmem>>, vector<1x1x64x256xbf16>
    %33 = vector.shape_cast %32 : vector<1x1x64x256xbf16> to vector<64x256xbf16>
    %cst_39 = arith.constant dense<0.000000e+00> : vector<16x256xf32>
    %34 = tpu.matmul %31, %33, %cst_39 {dimension_numbers = #tpu.dot_dimension_numbers<[1], [0], [0], [1], [0, 0, 1, 1], [], []>} : vector<16x64xbf16>, vector<64x256xbf16>, vector<16x256xf32> -> vector<16x256xf32>
    %35 = arith.addf %11, %34 : vector<16x256xf32>
    %c0_40 = arith.constant 0 : index
    %c1_41 = arith.constant 1 : index
    %c0_42 = arith.constant 0 : index
    %36 = vector.load %arg7[%c0_40, %c1_41, %c0_42] : memref<1x18x64xbf16, #tpu.memory_space<vmem>>, vector<1x16x64xbf16>
    %37 = vector.shape_cast %36 : vector<1x16x64xbf16> to vector<16x64xbf16>
    %c1_43 = arith.constant 1 : index
    %c1_44 = arith.constant 1 : index
    %c0_45 = arith.constant 0 : index
    %c0_46 = arith.constant 0 : index
    %38 = vector.load %arg2[%c1_43, %c1_44, %c0_45, %c0_46] : memref<2x2x64x256xbf16, #tpu.memory_space<vmem>>, vector<1x1x64x256xbf16>
    %39 = vector.shape_cast %38 : vector<1x1x64x256xbf16> to vector<64x256xbf16>
    %cst_47 = arith.constant dense<0.000000e+00> : vector<16x256xf32>
    %40 = tpu.matmul %37, %39, %cst_47 {dimension_numbers = #tpu.dot_dimension_numbers<[1], [0], [0], [1], [0, 0, 1, 1], [], []>} : vector<16x64xbf16>, vector<64x256xbf16>, vector<16x256xf32> -> vector<16x256xf32>
    %41 = arith.addf %35, %40 : vector<16x256xf32>
    %cst_48 = arith.constant 0.000000e+00 : f32
    %42 = vector.broadcast %cst_48 : f32 to vector<16x256xf32>
    %43 = arith.maximumf %41, %42 : vector<16x256xf32>
    %44 = arith.truncf %43 : vector<16x256xf32> to vector<16x256xbf16>
    %c1_49 = arith.constant 1 : index
    %c1_50 = arith.constant 1 : index
    %c0_51 = arith.constant 0 : index
    %45 = vector.load %arg8[%c1_49, %c1_50, %c0_51] : memref<2x18x256xbf16, #tpu.memory_space<vmem>>, vector<1x16x256xbf16>
    %46 = vector.shape_cast %45 : vector<1x16x256xbf16> to vector<16x256xbf16>
    %47 = vector.shape_cast %44 : vector<16x256xbf16> to vector<1x16x256xbf16>
    tpu.vector_store %arg8[%c1_49, %c1_50, %c0_51], %47 {strides = array<i32>} : memref<2x18x256xbf16, #tpu.memory_space<vmem>>, vector<1x16x256xbf16>,
    %c0_52 = arith.constant 0 : index
    %c0_53 = arith.constant 0 : index
    %48 = vector.load %arg5[%c0_52, %c0_53] : memref<1x256xf32, #tpu.memory_space<vmem>>, vector<1x256xf32>
    %49 = vector.shape_cast %48 : vector<1x256xf32> to vector<1x256xf32>
    %50 = vector.broadcast %49 : vector<1x256xf32> to vector<16x256xf32>
    %c0_54 = arith.constant 0 : index
    %c1_55 = arith.constant 1 : index
    %c0_56 = arith.constant 0 : index
    %51 = vector.load %arg8[%c0_54, %c1_55, %c0_56] : memref<2x18x256xbf16, #tpu.memory_space<vmem>>, vector<1x16x256xbf16>
    %52 = vector.shape_cast %51 : vector<1x16x256xbf16> to vector<16x256xbf16>
    %c0_57 = arith.constant 0 : index
    %c0_58 = arith.constant 0 : index
    %c0_59 = arith.constant 0 : index
    %c0_60 = arith.constant 0 : index
    %53 = vector.load %arg4[%c0_57, %c0_58, %c0_59, %c0_60] : memref<2x2x256x256xbf16, #tpu.memory_space<vmem>>, vector<1x1x256x256xbf16>
    %54 = vector.shape_cast %53 : vector<1x1x256x256xbf16> to vector<256x256xbf16>
    %cst_61 = arith.constant dense<0.000000e+00> : vector<16x256xf32>
    %55 = tpu.matmul %52, %54, %cst_61 {dimension_numbers = #tpu.dot_dimension_numbers<[1], [0], [0], [1], [0, 0, 1, 1], [], []>} : vector<16x256xbf16>, vector<256x256xbf16>, vector<16x256xf32> -> vector<16x256xf32>
    %56 = arith.addf %50, %55 : vector<16x256xf32>
    %c1_62 = arith.constant 1 : index
    %c0_63 = arith.constant 0 : index
    %c0_64 = arith.constant 0 : index
    %57 = vector.load %arg8[%c1_62, %c0_63, %c0_64] : memref<2x18x256xbf16, #tpu.memory_space<vmem>>, vector<1x16x256xbf16>
    %58 = vector.shape_cast %57 : vector<1x16x256xbf16> to vector<16x256xbf16>
    %c0_65 = arith.constant 0 : index
    %c1_66 = arith.constant 1 : index
    %c0_67 = arith.constant 0 : index
    %c0_68 = arith.constant 0 : index
    %59 = vector.load %arg4[%c0_65, %c1_66, %c0_67, %c0_68] : memref<2x2x256x256xbf16, #tpu.memory_space<vmem>>, vector<1x1x256x256xbf16>
    %60 = vector.shape_cast %59 : vector<1x1x256x256xbf16> to vector<256x256xbf16>
    %cst_69 = arith.constant dense<0.000000e+00> : vector<16x256xf32>
    %61 = tpu.matmul %58, %60, %cst_69 {dimension_numbers = #tpu.dot_dimension_numbers<[1], [0], [0], [1], [0, 0, 1, 1], [], []>} : vector<16x256xbf16>, vector<256x256xbf16>, vector<16x256xf32> -> vector<16x256xf32>
    %62 = arith.addf %56, %61 : vector<16x256xf32>
    %cst_70 = arith.constant 0.000000e+00 : f32
    %63 = vector.broadcast %cst_70 : f32 to vector<16x256xf32>
    %64 = arith.maximumf %62, %63 : vector<16x256xf32>
    %c0_71 = arith.constant 0 : index
    %c0_72 = arith.constant 0 : index
    %c0_73 = arith.constant 0 : index
    %c0_74 = arith.constant 0 : index
    %65 = vector.load %arg6[%c0_71, %c0_72, %c0_73, %c0_74] : memref<1x4x16x256xf32, #tpu.memory_space<vmem>>, vector<1x1x16x256xf32>
    %66 = vector.shape_cast %65 : vector<1x1x16x256xf32> to vector<16x256xf32>
    %67 = vector.shape_cast %64 : vector<16x256xf32> to vector<1x1x16x256xf32>
    tpu.vector_store %arg6[%c0_71, %c0_72, %c0_73, %c0_74], %67 {strides = array<i32>} : memref<1x4x16x256xf32, #tpu.memory_space<vmem>>, vector<1x1x16x256xf32>,
    %c1_75 = arith.constant 1 : index
    %c1_76 = arith.constant 1 : index
    %c0_77 = arith.constant 0 : index
    %68 = vector.load %arg8[%c1_75, %c1_76, %c0_77] : memref<2x18x256xbf16, #tpu.memory_space<vmem>>, vector<1x16x256xbf16>
    %69 = vector.shape_cast %68 : vector<1x16x256xbf16> to vector<16x256xbf16>
    %c1_78 = arith.constant 1 : index
    %c0_79 = arith.constant 0 : index
    %c0_80 = arith.constant 0 : index
    %c0_81 = arith.constant 0 : index
    %70 = vector.load %arg4[%c1_78, %c0_79, %c0_80, %c0_81] : memref<2x2x256x256xbf16, #tpu.memory_space<vmem>>, vector<1x1x256x256xbf16>
    %71 = vector.shape_cast %70 : vector<1x1x256x256xbf16> to vector<256x256xbf16>
    %cst_82 = arith.constant dense<0.000000e+00> : vector<16x256xf32>
    %72 = tpu.matmul %69, %71, %cst_82 {dimension_numbers = #tpu.dot_dimension_numbers<[1], [0], [0], [1], [0, 0, 1, 1], [], []>} : vector<16x256xbf16>, vector<256x256xbf16>, vector<16x256xf32> -> vector<16x256xf32>
    %73 = arith.addf %50, %72 : vector<16x256xf32>
    %c0_83 = arith.constant 0 : index
    %c1_84 = arith.constant 1 : index
    %c0_85 = arith.constant 0 : index
    %74 = vector.load %arg8[%c0_83, %c1_84, %c0_85] : memref<2x18x256xbf16, #tpu.memory_space<vmem>>, vector<1x16x256xbf16>
    %75 = vector.shape_cast %74 : vector<1x16x256xbf16> to vector<16x256xbf16>
    %c1_86 = arith.constant 1 : index
    %c1_87 = arith.constant 1 : index
    %c0_88 = arith.constant 0 : index
    %c0_89 = arith.constant 0 : index
    %76 = vector.load %arg4[%c1_86, %c1_87, %c0_88, %c0_89] : memref<2x2x256x256xbf16, #tpu.memory_space<vmem>>, vector<1x1x256x256xbf16>
    %77 = vector.shape_cast %76 : vector<1x1x256x256xbf16> to vector<256x256xbf16>
    %cst_90 = arith.constant dense<0.000000e+00> : vector<16x256xf32>
    %78 = tpu.matmul %75, %77, %cst_90 {dimension_numbers = #tpu.dot_dimension_numbers<[1], [0], [0], [1], [0, 0, 1, 1], [], []>} : vector<16x256xbf16>, vector<256x256xbf16>, vector<16x256xf32> -> vector<16x256xf32>
    %79 = arith.addf %73, %78 : vector<16x256xf32>
    %cst_91 = arith.constant 0.000000e+00 : f32
    %80 = vector.broadcast %cst_91 : f32 to vector<16x256xf32>
    %81 = arith.maximumf %79, %80 : vector<16x256xf32>
    %c0_92 = arith.constant 0 : index
    %c1_93 = arith.constant 1 : index
    %c0_94 = arith.constant 0 : index
    %c0_95 = arith.constant 0 : index
    %82 = vector.load %arg6[%c0_92, %c1_93, %c0_94, %c0_95] : memref<1x4x16x256xf32, #tpu.memory_space<vmem>>, vector<1x1x16x256xf32>
    %83 = vector.shape_cast %82 : vector<1x1x16x256xf32> to vector<16x256xf32>
    %84 = vector.shape_cast %81 : vector<16x256xf32> to vector<1x1x16x256xf32>
    tpu.vector_store %arg6[%c0_92, %c1_93, %c0_94, %c0_95], %84 {strides = array<i32>} : memref<1x4x16x256xf32, #tpu.memory_space<vmem>>, vector<1x1x16x256xf32>,
    %c1_96 = arith.constant 1 : index
    %c1_97 = arith.constant 1 : index
    %c0_98 = arith.constant 0 : index
    %85 = vector.load %arg8[%c1_96, %c1_97, %c0_98] : memref<2x18x256xbf16, #tpu.memory_space<vmem>>, vector<1x16x256xbf16>
    %86 = vector.shape_cast %85 : vector<1x16x256xbf16> to vector<16x256xbf16>
    %c0_99 = arith.constant 0 : index
    %c0_100 = arith.constant 0 : index
    %c0_101 = arith.constant 0 : index
    %c0_102 = arith.constant 0 : index
    %87 = vector.load %arg4[%c0_99, %c0_100, %c0_101, %c0_102] : memref<2x2x256x256xbf16, #tpu.memory_space<vmem>>, vector<1x1x256x256xbf16>
    %88 = vector.shape_cast %87 : vector<1x1x256x256xbf16> to vector<256x256xbf16>
    %cst_103 = arith.constant dense<0.000000e+00> : vector<16x256xf32>
    %89 = tpu.matmul %86, %88, %cst_103 {dimension_numbers = #tpu.dot_dimension_numbers<[1], [0], [0], [1], [0, 0, 1, 1], [], []>} : vector<16x256xbf16>, vector<256x256xbf16>, vector<16x256xf32> -> vector<16x256xf32>
    %90 = arith.addf %50, %89 : vector<16x256xf32>
    %c0_104 = arith.constant 0 : index
    %c1_105 = arith.constant 1 : index
    %c0_106 = arith.constant 0 : index
    %91 = vector.load %arg8[%c0_104, %c1_105, %c0_106] : memref<2x18x256xbf16, #tpu.memory_space<vmem>>, vector<1x16x256xbf16>
    %92 = vector.shape_cast %91 : vector<1x16x256xbf16> to vector<16x256xbf16>
    %c0_107 = arith.constant 0 : index
    %c1_108 = arith.constant 1 : index
    %c0_109 = arith.constant 0 : index
    %c0_110 = arith.constant 0 : index
    %93 = vector.load %arg4[%c0_107, %c1_108, %c0_109, %c0_110] : memref<2x2x256x256xbf16, #tpu.memory_space<vmem>>, vector<1x1x256x256xbf16>
    %94 = vector.shape_cast %93 : vector<1x1x256x256xbf16> to vector<256x256xbf16>
    %cst_111 = arith.constant dense<0.000000e+00> : vector<16x256xf32>
    %95 = tpu.matmul %92, %94, %cst_111 {dimension_numbers = #tpu.dot_dimension_numbers<[1], [0], [0], [1], [0, 0, 1, 1], [], []>} : vector<16x256xbf16>, vector<256x256xbf16>, vector<16x256xf32> -> vector<16x256xf32>
    %96 = arith.addf %90, %95 : vector<16x256xf32>
    %cst_112 = arith.constant 0.000000e+00 : f32
    %97 = vector.broadcast %cst_112 : f32 to vector<16x256xf32>
    %98 = arith.maximumf %96, %97 : vector<16x256xf32>
    %c0_113 = arith.constant 0 : index
    %c2_114 = arith.constant 2 : index
    %c0_115 = arith.constant 0 : index
    %c0_116 = arith.constant 0 : index
    %99 = vector.load %arg6[%c0_113, %c2_114, %c0_115, %c0_116] : memref<1x4x16x256xf32, #tpu.memory_space<vmem>>, vector<1x1x16x256xf32>
    %100 = vector.shape_cast %99 : vector<1x1x16x256xf32> to vector<16x256xf32>
    %101 = vector.shape_cast %98 : vector<16x256xf32> to vector<1x1x16x256xf32>
    tpu.vector_store %arg6[%c0_113, %c2_114, %c0_115, %c0_116], %101 {strides = array<i32>} : memref<1x4x16x256xf32, #tpu.memory_space<vmem>>, vector<1x1x16x256xf32>,
    %c0_117 = arith.constant 0 : index
    %c2_118 = arith.constant 2 : index
    %c0_119 = arith.constant 0 : index
    %102 = vector.load %arg8[%c0_117, %c2_118, %c0_119] : memref<2x18x256xbf16, #tpu.memory_space<vmem>>, vector<1x16x256xbf16>
    %103 = vector.shape_cast %102 : vector<1x16x256xbf16> to vector<16x256xbf16>
    %c1_120 = arith.constant 1 : index
    %c0_121 = arith.constant 0 : index
    %c0_122 = arith.constant 0 : index
    %c0_123 = arith.constant 0 : index
    %104 = vector.load %arg4[%c1_120, %c0_121, %c0_122, %c0_123] : memref<2x2x256x256xbf16, #tpu.memory_space<vmem>>, vector<1x1x256x256xbf16>
    %105 = vector.shape_cast %104 : vector<1x1x256x256xbf16> to vector<256x256xbf16>
    %cst_124 = arith.constant dense<0.000000e+00> : vector<16x256xf32>
    %106 = tpu.matmul %103, %105, %cst_124 {dimension_numbers = #tpu.dot_dimension_numbers<[1], [0], [0], [1], [0, 0, 1, 1], [], []>} : vector<16x256xbf16>, vector<256x256xbf16>, vector<16x256xf32> -> vector<16x256xf32>
    %107 = arith.addf %50, %106 : vector<16x256xf32>
    %c1_125 = arith.constant 1 : index
    %c1_126 = arith.constant 1 : index
    %c0_127 = arith.constant 0 : index
    %108 = vector.load %arg8[%c1_125, %c1_126, %c0_127] : memref<2x18x256xbf16, #tpu.memory_space<vmem>>, vector<1x16x256xbf16>
    %109 = vector.shape_cast %108 : vector<1x16x256xbf16> to vector<16x256xbf16>
    %c1_128 = arith.constant 1 : index
    %c1_129 = arith.constant 1 : index
    %c0_130 = arith.constant 0 : index
    %c0_131 = arith.constant 0 : index
    %110 = vector.load %arg4[%c1_128, %c1_129, %c0_130, %c0_131] : memref<2x2x256x256xbf16, #tpu.memory_space<vmem>>, vector<1x1x256x256xbf16>
    %111 = vector.shape_cast %110 : vector<1x1x256x256xbf16> to vector<256x256xbf16>
    %cst_132 = arith.constant dense<0.000000e+00> : vector<16x256xf32>
    %112 = tpu.matmul %109, %111, %cst_132 {dimension_numbers = #tpu.dot_dimension_numbers<[1], [0], [0], [1], [0, 0, 1, 1], [], []>} : vector<16x256xbf16>, vector<256x256xbf16>, vector<16x256xf32> -> vector<16x256xf32>
    %113 = arith.addf %107, %112 : vector<16x256xf32>
    %cst_133 = arith.constant 0.000000e+00 : f32
    %114 = vector.broadcast %cst_133 : f32 to vector<16x256xf32>
    %115 = arith.maximumf %113, %114 : vector<16x256xf32>
    %c0_134 = arith.constant 0 : index
    %c3 = arith.constant 3 : index
    %c0_135 = arith.constant 0 : index
    %c0_136 = arith.constant 0 : index
    %116 = vector.load %arg6[%c0_134, %c3, %c0_135, %c0_136] : memref<1x4x16x256xf32, #tpu.memory_space<vmem>>, vector<1x1x16x256xf32>
    %117 = vector.shape_cast %116 : vector<1x1x16x256xf32> to vector<16x256xf32>
    %118 = vector.shape_cast %115 : vector<16x256xf32> to vector<1x1x16x256xf32>
    tpu.vector_store %arg6[%c0_134, %c3, %c0_135, %c0_136], %118 {strides = array<i32>} : memref<1x4x16x256xf32, #tpu.memory_space<vmem>>, vector<1x1x16x256xf32>,
    return
  }
  func.func @transform_0(%arg0: i32) -> (i32, i32, i32) {
    %c0_i32 = arith.constant 0 : i32
    %c0_i32_0 = arith.constant 0 : i32
    %c0_i32_1 = arith.constant 0 : i32
    return %arg0, %c0_i32, %c0_i32_0 : i32, i32, i32
  }
  func.func @transform_1(%arg0: i32) -> (i32, i32, i32, i32) {
    %c0_i32 = arith.constant 0 : i32
    %c0_i32_0 = arith.constant 0 : i32
    %c0_i32_1 = arith.constant 0 : i32
    %c0_i32_2 = arith.constant 0 : i32
    %c0_i32_3 = arith.constant 0 : i32
    return %c0_i32, %c0_i32_0, %c0_i32_1, %c0_i32_2 : i32, i32, i32, i32
  }
  func.func @transform_2(%arg0: i32) -> (i32, i32) {
    %c0_i32 = arith.constant 0 : i32
    %c0_i32_0 = arith.constant 0 : i32
    %c0_i32_1 = arith.constant 0 : i32
    return %c0_i32, %c0_i32_0 : i32, i32
  }
  func.func @transform_3(%arg0: i32) -> (i32, i32, i32, i32) {
    %c0_i32 = arith.constant 0 : i32
    %c0_i32_0 = arith.constant 0 : i32
    %c0_i32_1 = arith.constant 0 : i32
    %c0_i32_2 = arith.constant 0 : i32
    %c0_i32_3 = arith.constant 0 : i32
    return %c0_i32, %c0_i32_0, %c0_i32_1, %c0_i32_2 : i32, i32, i32, i32
  }
  func.func @transform_4(%arg0: i32) -> (i32, i32) {
    %c0_i32 = arith.constant 0 : i32
    %c0_i32_0 = arith.constant 0 : i32
    %c0_i32_1 = arith.constant 0 : i32
    return %c0_i32, %c0_i32_0 : i32, i32
  }
  func.func @transform_5(%arg0: i32) -> (i32, i32, i32, i32) {
    %c0_i32 = arith.constant 0 : i32
    %c0_i32_0 = arith.constant 0 : i32
    %c0_i32_1 = arith.constant 0 : i32
    %c0_i32_2 = arith.constant 0 : i32
    return %arg0, %c0_i32, %c0_i32_0, %c0_i32_1 : i32, i32, i32, i32
  }
}

</mosaic_0001>

<llo_original>
// kernel: conv_transpose_neural_network.1
$region0: #{conv_transpose_neural_network.1}
  #allocation0 [shape = 'u32[]', space=smem, size = 0x4, offset = 0x4, fixed_abs, tag = 'smem constant byte address 0x4 - core index']
  #allocation1 [shape = 'u32[72,128]{1,0:T(1,128)}', space=vmem, size = 0x9000, scoped, tag = 'internal scratch']
  #allocation2 [shape = 'bf16[1,18,64]{2,1,0:T(8,128)(2,1)}', space=vmem, size = 0x1800, scoped, tag = 'scratch operand']
  #allocation3 [shape = 'bf16[2,18,256]{2,1,0:T(8,128)(2,1)}', space=vmem, size = 0x6000, scoped, tag = 'scratch operand']
  %s0 = inlined_call_operand.vmem [shape: bf16[2,16,64], index: 0, kind: input, shape index: {}]
  %s1 = inlined_call_operand.vmem [shape: bf16[2,2,64,256], index: 1, kind: input, shape index: {}]
  %s2 = inlined_call_operand.vmem [shape: f32[1,256], index: 2, kind: input, shape index: {}]
  %s3 = inlined_call_operand.hbm [shape: bf16[2,2,256,256], index: 3, kind: input, shape index: {}]
  %s4 = inlined_call_operand.vmem [shape: f32[1,256], index: 4, kind: input, shape index: {}]
  %s5 = inlined_call_operand.vmem [shape: f32[2,4,16,256], index: 5, kind: output, shape index: {}]
  %s6 = sld [smem:[#allocation0]]
  $region57: #{conv_transpose_neural_network.1} parent=0
    _
  %s8 = ssub.s32 1, %s6
  %s9 = scalar_select 0, %s8, %s6
  $region1: #{conv_transpose_neural_network.1} parent=0
    #allocation4 [shape = 'u8[524288]{0}', space=vmem, size = 0x80000, scoped, tag = 'input window, operand 3, single buffered']
    #allocation5 [shape = 's32[2]{0}', space=sflag, size = 0x8, scoped, tag = 'scoped memory for conv_transpose_neural_network.1']
    %10 = vsyncpa [#allocation5], 0
    loop: start=0, step=1, limit=4
    $region2: #{conv_transpose_neural_network.1} parent=1 // loop_pre_header
      _
    $region3: #{conv_transpose_neural_network.1} parent=1 // loop_header
      %s12 = sphi 0, %s16
      %p13 = scmp.ge.s32.totalorder %s12, 4
      %s22 = sphi 0, %s24
      %s25 = sphi 0, %s22
      %s26 = sphi 0, %s25
      %s42 = sphi 0, %s26
      %s46 = sphi 0, %s46
      %s48 = sphi 0, %s46
      %s49 = sphi 0, %s48
      %s63 = sphi 0, %s49
      %s67 = sphi 0, %s67
      %s69 = sphi 0, %s67
      %s70 = sphi 0, %s69
      %s84 = sphi 0, %s70
      %s88 = sphi 0, %s88
      %s90 = sphi 0, %s88
      %s91 = sphi 0, %s90
      %s105 = sphi 0, %s91
      %s109 = sphi 0, %s109
      %s111 = sphi 0, %s109
      %s112 = sphi 0, %s111
      %s126 = sphi 0, %s112
      %s132 = sphi 0, %s134
      %s135 = sphi 0, %s132
      %s136 = sphi 0, %s135
      %s152 = sphi 0, %s136
    $region4: #{conv_transpose_neural_network.1} parent=1 // loop_header_branch
      %15 = sbr.rel (%p13) target = $region8
    $region5: #{conv_transpose_neural_network.1} parent=1 // loop_body
      %s17 = ssub.s32 %s12, 1
      %s18 = ssub.s32 %s12, 2
      %s19 = sadd.s32 %s12, 1
      %s20 = ssub.s32 %s12, %s19
      %p21 = scmp.eq.s32.totalorder %s20, 0
      %s23 = sadd.s32 %s22, 1
      %s24 = scalar_select %p21, %s22, %s23
      %p27 = pneg %p21
      %p28 = scmp.eq.s32.totalorder %s12, 1
      %p29 = por %p27, %p28
      %p30 = scmp.ne.s32.totalorder %s22, %s25
      %p31 = scmp.eq.s32.totalorder %s12, 0
      %p32 = por %p30, %p31
      %p33 = scmp.ne.s32.totalorder %s22, %s25
      %p34 = scmp.eq.s32.totalorder %s17, 1
      %p35 = por %p33, %p34
      %p36 = scmp.ne.s32.totalorder %s25, %s26
      %p37 = scmp.eq.s32.totalorder %s17, 0
      %p38 = por %p36, %p37
      %p39 = scmp.ne.s32.totalorder %s25, %s26
      %p40 = scmp.eq.s32.totalorder %s18, 1
      %p41 = por %p39, %p40
      %p43 = scmp.ne.s32.totalorder %s26, %s42
      %p44 = scmp.eq.s32.totalorder %s18, 0
      %p45 = por %p43, %p44
      %s47 = sadd.s32 %s46, 1
      %p50 = scmp.eq.s32.totalorder %s12, 1
      %p51 = scmp.ne.s32.totalorder %s46, %s48
      %p52 = scmp.eq.s32.totalorder %s12, 0
      %p53 = por %p51, %p52
      %p54 = scmp.ne.s32.totalorder %s46, %s48
      %p55 = scmp.eq.s32.totalorder %s17, 1
      %p56 = por %p54, %p55
      %p57 = scmp.ne.s32.totalorder %s48, %s49
      %p58 = scmp.eq.s32.totalorder %s17, 0
      %p59 = por %p57, %p58
      %p60 = scmp.ne.s32.totalorder %s48, %s49
      %p61 = scmp.eq.s32.totalorder %s18, 1
      %p62 = por %p60, %p61
      %p64 = scmp.ne.s32.totalorder %s49, %s63
      %p65 = scmp.eq.s32.totalorder %s18, 0
      %p66 = por %p64, %p65
      %s68 = sadd.s32 %s67, 1
      %p71 = scmp.eq.s32.totalorder %s12, 1
      %p72 = scmp.ne.s32.totalorder %s67, %s69
      %p73 = scmp.eq.s32.totalorder %s12, 0
      %p74 = por %p72, %p73
      %p75 = scmp.ne.s32.totalorder %s67, %s69
      %p76 = scmp.eq.s32.totalorder %s17, 1
      %p77 = por %p75, %p76
      %p78 = scmp.ne.s32.totalorder %s69, %s70
      %p79 = scmp.eq.s32.totalorder %s17, 0
      %p80 = por %p78, %p79
      %p81 = scmp.ne.s32.totalorder %s69, %s70
      %p82 = scmp.eq.s32.totalorder %s18, 1
      %p83 = por %p81, %p82
      %p85 = scmp.ne.s32.totalorder %s70, %s84
      %p86 = scmp.eq.s32.totalorder %s18, 0
      %p87 = por %p85, %p86
      %s89 = sadd.s32 %s88, 1
      %p92 = scmp.eq.s32.totalorder %s12, 1
      %p93 = scmp.ne.s32.totalorder %s88, %s90
      %p94 = scmp.eq.s32.totalorder %s12, 0
      %p95 = por %p93, %p94
      %p96 = scmp.ne.s32.totalorder %s88, %s90
      %p97 = scmp.eq.s32.totalorder %s17, 1
      %p98 = por %p96, %p97
      %p99 = scmp.ne.s32.totalorder %s90, %s91
      %p100 = scmp.eq.s32.totalorder %s17, 0
      %p101 = por %p99, %p100
      %p102 = scmp.ne.s32.totalorder %s90, %s91
      %p103 = scmp.eq.s32.totalorder %s18, 1
      %p104 = por %p102, %p103
      %p106 = scmp.ne.s32.totalorder %s91, %s105
      %p107 = scmp.eq.s32.totalorder %s18, 0
      %p108 = por %p106, %p107
      %s110 = sadd.s32 %s109, 1
      %p113 = scmp.eq.s32.totalorder %s12, 1
      %p114 = scmp.ne.s32.totalorder %s109, %s111
      %p115 = scmp.eq.s32.totalorder %s12, 0
      %p116 = por %p114, %p115
      %p117 = scmp.ne.s32.totalorder %s109, %s111
      %p118 = scmp.eq.s32.totalorder %s17, 1
      %p119 = por %p117, %p118
      %p120 = scmp.ne.s32.totalorder %s111, %s112
      %p121 = scmp.eq.s32.totalorder %s17, 0
      %p122 = por %p120, %p121
      %p123 = scmp.ne.s32.totalorder %s111, %s112
      %p124 = scmp.eq.s32.totalorder %s18, 1
      %p125 = por %p123, %p124
      %p127 = scmp.ne.s32.totalorder %s112, %s126
      %p128 = scmp.eq.s32.totalorder %s18, 0
      %p129 = por %p127, %p128
      %s130 = ssub.s32 %s12, %s19
      %p131 = scmp.eq.s32.totalorder %s130, 0
      %s133 = sadd.s32 %s132, 1
      %s134 = scalar_select %p131, %s132, %s133
      %p137 = pneg %p131
      %p138 = scmp.eq.s32.totalorder %s12, 1
      %p139 = por %p137, %p138
      %p140 = scmp.ne.s32.totalorder %s132, %s135
      %p141 = scmp.eq.s32.totalorder %s12, 0
      %p142 = por %p140, %p141
      %p143 = scmp.ne.s32.totalorder %s132, %s135
      %p144 = scmp.eq.s32.totalorder %s17, 1
      %p145 = por %p143, %p144
      %p146 = scmp.ne.s32.totalorder %s135, %s136
      %p147 = scmp.eq.s32.totalorder %s17, 0
      %p148 = por %p146, %p147
      %p149 = scmp.ne.s32.totalorder %s135, %s136
      %p150 = scmp.eq.s32.totalorder %s18, 1
      %p151 = por %p149, %p150
      %p153 = scmp.ne.s32.totalorder %s136, %s152
      %p154 = scmp.eq.s32.totalorder %s18, 0
      %p155 = por %p153, %p154
      %p156 = scmp.le.s32.totalorder 1, %s12
      %p157 = scmp.lt.s32.totalorder %s12, 3
      %p158 = pnand %p156, %p157
      %p159 = pneg %p158
      // Predicated region
      $region9: #{conv_transpose_neural_network.1} parent=5 // pred_check
        _
      $region10: #{conv_transpose_neural_network.1} parent=5 // pred_check_branch
        %161 = sbr.rel (%p158) target = $region12
      $region11: #{conv_transpose_neural_network.1} parent=5 // pred_region
        %s162 = ssub.s32 %s12, 1
        // Predicated region
        $region13: #{conv_transpose_neural_network.1} parent=11 // pred_check
          %p163 = pneg %p59
        $region14: #{conv_transpose_neural_network.1} parent=11 // pred_check_branch
          %165 = sbr.rel (%p163) target = $region16
        $region15: #{conv_transpose_neural_network.1} parent=11 // pred_region
          _
        $region16: #{conv_transpose_neural_network.1} parent=11 // pred_fallthru
          _
        // Predicated region
        $region17: #{conv_transpose_neural_network.1} parent=11 // pred_check
          %p166 = pneg %p80
        $region18: #{conv_transpose_neural_network.1} parent=11 // pred_check_branch
          %168 = sbr.rel (%p166) target = $region20
        $region19: #{conv_transpose_neural_network.1} parent=11 // pred_region
          _
        $region20: #{conv_transpose_neural_network.1} parent=11 // pred_fallthru
          _
        // Predicated region
        $region21: #{conv_transpose_neural_network.1} parent=11 // pred_check
          %p169 = pneg %p101
        $region22: #{conv_transpose_neural_network.1} parent=11 // pred_check_branch
          %171 = sbr.rel (%p169) target = $region24
        $region23: #{conv_transpose_neural_network.1} parent=11 // pred_region
          %173 = vsyncadd [#allocation5], 0
          %s174 = sshll.u32 %s3, 4
          %s175 = int_to_ptr.hbm [resolvable:$true] %s174
          %s176 = sshll.u32 [#allocation4], 4
          %s177 = int_to_ptr.vmem [resolvable:$true] %s176
          %182 = dma.hbm_to_vmem [thread:$0]  %s175, 16384, %s177, [#allocation5], 128, 128, 8
        $region24: #{conv_transpose_neural_network.1} parent=11 // pred_fallthru
          _
        // Predicated region
        $region25: #{conv_transpose_neural_network.1} parent=11 // pred_check
          %p183 = pneg %p122
        $region26: #{conv_transpose_neural_network.1} parent=11 // pred_check_branch
          %185 = sbr.rel (%p183) target = $region28
        $region27: #{conv_transpose_neural_network.1} parent=11 // pred_region
          _
        $region28: #{conv_transpose_neural_network.1} parent=11 // pred_fallthru
          _
      $region12: #{conv_transpose_neural_network.1} parent=5 // pred_fallthru
        _
      %p186 = scmp.lt.s32.totalorder %s12, 2
      // Predicated region
      $region29: #{conv_transpose_neural_network.1} parent=5 // pred_check
        %p187 = pneg %p186
      $region30: #{conv_transpose_neural_network.1} parent=5 // pred_check_branch
        %189 = sbr.rel (%p187) target = $region32
      $region31: #{conv_transpose_neural_network.1} parent=5 // pred_region
        // Predicated region
        $region33: #{conv_transpose_neural_network.1} parent=31 // pred_check
          %p190 = pneg %p32
        $region34: #{conv_transpose_neural_network.1} parent=31 // pred_check_branch
          %192 = sbr.rel (%p190) target = $region36
        $region35: #{conv_transpose_neural_network.1} parent=31 // pred_region
          %p193 = scmp.lt.s32.totalorder %s12, 1
          %s194 = scalar_select %p193, %s12, 1
          %s195 = smul.addr %s194, 2
          %s196 = smul.addr %s195, 4
          %s197 = scalar_lea.vmem %s0, %s196
        $region36: #{conv_transpose_neural_network.1} parent=31 // pred_fallthru
          _
      $region32: #{conv_transpose_neural_network.1} parent=5 // pred_fallthru
        _
      %p198 = scmp.le.s32.totalorder 1, %s12
      %p199 = scmp.lt.s32.totalorder %s12, 3
      %p200 = pnand %p198, %p199
      %p201 = pneg %p200
      // Predicated region
      $region37: #{conv_transpose_neural_network.1} parent=5 // pred_check
        _
      $region38: #{conv_transpose_neural_network.1} parent=5 // pred_check_branch
        %203 = sbr.rel (%p200) target = $region40
      $region39: #{conv_transpose_neural_network.1} parent=5 // pred_region
        %s204 = ssub.s32 %s12, 1
        // Predicated region
        $region41: #{conv_transpose_neural_network.1} parent=39 // pred_check
          %p205 = pneg %p101
        $region42: #{conv_transpose_neural_network.1} parent=39 // pred_check_branch
          %207 = sbr.rel (%p205) target = $region44
        $region43: #{conv_transpose_neural_network.1} parent=39 // pred_region
          %209 = dma.done [#allocation5], 16384
        $region44: #{conv_transpose_neural_network.1} parent=39 // pred_fallthru
          _
        %p210 = scmp.lt.s32.totalorder %s17, 1
        %s211 = scalar_select %p210, %s17, 1
        %s212 = smul.addr %s211, 2
        %s213 = smul.addr %s212, 4
        %s214 = scalar_lea.vmem %s0, %s213
        %p215 = pneg %p38
        %p216 = pneg %p35
        %p217 = pneg %p59
        %p218 = pneg %p56
        %p219 = pneg %p80
        %p220 = pneg %p77
        %p221 = pneg %p101
        %p222 = pneg %p98
        %p223 = pneg %p122
        %p224 = pneg %p119
        %p225 = pneg %p148
        %p226 = pneg %p145
        %p227 = scmp.lt.s32.totalorder %s17, 1
        %s228 = scalar_select %p227, %s17, 1
        %s229 = smul.addr %s228, 16
        %s230 = smul.addr %s229, 8
        %s231 = scalar_lea.vmem %s5, %s230
        %p232 = scmp.lt.s32.totalorder %s17, 1
        %s233 = scalar_select %p232, %s17, 1
        %s234 = smul.addr %s233, 2
        %s235 = smul.addr %s234, 4
        %s236 = scalar_lea.vmem %s0, %s235
        %p237 = scmp.lt.s32.totalorder %s17, 1
        %s238 = scalar_select %p237, %s17, 1
        %s239 = smul.addr %s238, 16
        %s240 = smul.addr %s239, 8
        %s241 = scalar_lea.vmem %s5, %s240
        %vm243 = vcmask 519168
        %244 = vst.msk [vmem:[#allocation2] sm:$0xf] %vm243, 0
        %245 = vst.msk [vmem:[#allocation2 + $0x4] sm:$0xf] %vm243, 0
        %vm246 = vcmask 516096
        %247 = vst.msk [vmem:[#allocation2 + $0x8] sm:$0x1] %vm246, 0
        %v248 = vld [vmem:[%s236] sm:$0xf]
        %v249 = vld [vmem:[%s236 + $0x4] sm:$0xf]
        %vm250 = vsmask.f32 256
        %vm251 = vsmask.f32 4368
        %vm252 = vmor %vm250, %vm251
        %v254 = vshrl.u32 %v248, 16
        %v256 = vrot.slane %v254, 7
        %v257 = vshll.u32 %v248, 16
        %v259 = vor.u32 %v256, %v257
        %v260 = vrot.slane %v256, 4
        %v262 = vshrl.u32 %v249, 16
        %v264 = vrot.slane %v262, 7
        %v265 = vshll.u32 %v249, 16
        %v267 = vor.u32 %v264, %v265
        %v268 = vsel %vm252, %v260, %v267
        %v269 = vrot.slane %v264, 4
        %vm273 = vcmask 519168
        %vm274 = vsmask.f32 7938
        %vm275 = vmand %vm273, %vm274
        %v276 = vld [vmem:[#allocation2] sm:$0xf]
        %v277 = vsel %vm275, %v259, %v276
        %278 = vst [vmem:[#allocation2] sm:$0xf] %v277
        %279 = vst.msk [vmem:[#allocation2 + $0x4] sm:$0xf] %vm243, %v268
        %vm280 = vcmask 516096
        %vm281 = vmand %vm280, %vm250
        %v282 = vld [vmem:[#allocation2 + $0x8] sm:$0x1]
        %v283 = vsel %vm281, %v269, %v282
        %284 = vst [vmem:[#allocation2 + $0x8] sm:$0x1] %v283
        %285 = vst [vmem:[#allocation3] sm:$0xff] 0
        %286 = vst [vmem:[#allocation3 + $0x8] sm:$0xff] 0
        %287 = vst [vmem:[#allocation3 + $0x10] sm:$0x11] 0
        %288 = vst [vmem:[#allocation3 + $0x18] sm:$0xff] 0
        %289 = vst [vmem:[#allocation3 + $0x20] sm:$0xff] 0
        %290 = vst [vmem:[#allocation3 + $0x28] sm:$0x11] 0
        %v291 = vld [vmem:[%s2] sm:$0x3]
        %v293 = vperm.slane %v291, 0
        %v294 = vperm.slane %v291, 1
        %v297 = vld [vmem:[#allocation2] sm:$0xf]
        %v298 = vld [vmem:[#allocation2 + $0x4] sm:$0xf]
        %v299 = vld [vmem:[#allocation2 + $0x8] sm:$0x1]
        %v300 = vld [vmem:[%s1] sm:$0xff]
        %v301 = vld [vmem:[%s1 + $0x8] sm:$0xff]
        %v302 = vld [vmem:[%s1 + $0x10] sm:$0xff]
        %v303 = vld [vmem:[%s1 + $0x18] sm:$0xff]
        %v304 = vld [vmem:[%s1 + $0x20] sm:$0xff]
        %v305 = vld [vmem:[%s1 + $0x28] sm:$0xff]
        %v306 = vld [vmem:[%s1 + $0x30] sm:$0xff]
        %v307 = vld [vmem:[%s1 + $0x38] sm:$0xff]
        %v311 = vunpack.c.l.b16 %v297
        %v312 = vunpack.c.l.b16 %v298
        %v313 = vunpack.c.l.b16 %v299
        %v314 = vpack.c.b16 %v312, %v311
        %v315 = vpack.c.b16 %v313, %v313
        %vm316 = vsmask.f32 7424
        %v318 = vshrl.u32 %v314, 16
        %v320 = vshll.u32 %v314, 16
        %v322 = vrot.slane %v320, 1
        %v323 = vor.u32 %v318, %v322
        %v325 = vshll.u32 %v315, 16
        %v327 = vrot.slane %v325, 1
        %v328 = vsel %vm316, %v323, %v327
        %v337 = vunpack.c.l.b16 %v300
        %v338 = vunpack.c.h.b16 %v300
        %v339 = vunpack.c.l.b16 %v301
        %v340 = vunpack.c.h.b16 %v301
        %v341 = vunpack.c.l.b16 %v302
        %v342 = vunpack.c.h.b16 %v302
        %v343 = vunpack.c.l.b16 %v303
        %v344 = vunpack.c.h.b16 %v303
        %v345 = vunpack.c.l.b16 %v304
        %v346 = vunpack.c.h.b16 %v304
        %v347 = vunpack.c.l.b16 %v305
        %v348 = vunpack.c.h.b16 %v305
        %v349 = vunpack.c.l.b16 %v306
        %v350 = vunpack.c.h.b16 %v306
        %v351 = vunpack.c.l.b16 %v307
        %v352 = vunpack.c.h.b16 %v307
        %v353 = vpack.c.b16 %v339, %v337
        %v354 = vpack.c.b16 %v340, %v338
        %v355 = vpack.c.b16 %v343, %v341
        %v356 = vpack.c.b16 %v344, %v342
        %v357 = vpack.c.b16 %v347, %v345
        %v358 = vpack.c.b16 %v348, %v346
        %v359 = vpack.c.b16 %v351, %v349
        %v360 = vpack.c.b16 %v352, %v350
        %vm369 = vcmask 523264
        %v371 = vsel %vm369, %v328, 0
        %373 = vmatpush.bf16.msra.mxu0 0
        %374 = vmatpush.bf16.msra.mxu0 0
        %375 = vmatpush.bf16.msra.mxu0 0
        %376 = vmatpush.bf16.msra.mxu0 0
        %377 = vmatpush.bf16.msra.mxu0 %v359
        %378 = vmatpush.bf16.msra.mxu0 %v357
        %379 = vmatpush.bf16.msra.mxu0 %v355
        %380 = vmatpush.bf16.msra.mxu0 %v353
        %381 = vmatmul.bf16.gmra.mxu0 %v371
        %v382 = vpop.f32.mrf.mxu0
        %v383 = vadd.f32 0.0, %v382
        %v384 = vpop.f32.mrf.mxu0
        %v385 = vadd.f32 0.0, %v384
        %386 = vdwg.mxu0
        %387 = vmatpush.bf16.msra.mxu0 0
        %388 = vmatpush.bf16.msra.mxu0 0
        %389 = vmatpush.bf16.msra.mxu0 0
        %390 = vmatpush.bf16.msra.mxu0 0
        %391 = vmatpush.bf16.msra.mxu0 %v360
        %392 = vmatpush.bf16.msra.mxu0 %v358
        %393 = vmatpush.bf16.msra.mxu0 %v356
        %394 = vmatpush.bf16.msra.mxu0 %v354
        %395 = vmatmul.bf16.gmra.mxu0 %v371
        %v396 = vpop.f32.mrf.mxu0
        %v397 = vadd.f32 0.0, %v396
        %v398 = vpop.f32.mrf.mxu0
        %v399 = vadd.f32 0.0, %v398
        %400 = vdwg.mxu0
        %v401 = vadd.f32 %v293, %v383
        %v402 = vadd.f32 %v294, %v397
        %v403 = vadd.f32 %v293, %v385
        %v404 = vadd.f32 %v294, %v399
        %v405 = vld [vmem:[#allocation2] sm:$0xf]
        %v406 = vld [vmem:[#allocation2 + $0x4] sm:$0xf]
        %s407 = scalar_lea.vmem %s1, 64
        %v408 = vld [vmem:[%s407] sm:$0xff]
        %v409 = vld [vmem:[%s407 + $0x8] sm:$0xff]
        %v410 = vld [vmem:[%s407 + $0x10] sm:$0xff]
        %v411 = vld [vmem:[%s407 + $0x18] sm:$0xff]
        %v412 = vld [vmem:[%s407 + $0x20] sm:$0xff]
        %v413 = vld [vmem:[%s407 + $0x28] sm:$0xff]
        %v414 = vld [vmem:[%s407 + $0x30] sm:$0xff]
        %v415 = vld [vmem:[%s407 + $0x38] sm:$0xff]
        %v418 = vunpack.c.l.b16 %v405
        %v419 = vunpack.c.l.b16 %v406
        %v420 = vpack.c.b16 %v419, %v418
        %v429 = vunpack.c.l.b16 %v408
        %v430 = vunpack.c.h.b16 %v408
        %v431 = vunpack.c.l.b16 %v409
        %v432 = vunpack.c.h.b16 %v409
        %v433 = vunpack.c.l.b16 %v410
        %v434 = vunpack.c.h.b16 %v410
        %v435 = vunpack.c.l.b16 %v411
        %v436 = vunpack.c.h.b16 %v411
        %v437 = vunpack.c.l.b16 %v412
        %v438 = vunpack.c.h.b16 %v412
        %v439 = vunpack.c.l.b16 %v413
        %v440 = vunpack.c.h.b16 %v413
        %v441 = vunpack.c.l.b16 %v414
        %v442 = vunpack.c.h.b16 %v414
        %v443 = vunpack.c.l.b16 %v415
        %v444 = vunpack.c.h.b16 %v415
        %v445 = vpack.c.b16 %v431, %v429
        %v446 = vpack.c.b16 %v432, %v430
        %v447 = vpack.c.b16 %v435, %v433
        %v448 = vpack.c.b16 %v436, %v434
        %v449 = vpack.c.b16 %v439, %v437
        %v450 = vpack.c.b16 %v440, %v438
        %v451 = vpack.c.b16 %v443, %v441
        %v452 = vpack.c.b16 %v444, %v442
        %v462 = vsel %vm369, %v420, 0
        %464 = vmatpush.bf16.msra.mxu0 0
        %465 = vmatpush.bf16.msra.mxu0 0
        %466 = vmatpush.bf16.msra.mxu0 0
        %467 = vmatpush.bf16.msra.mxu0 0
        %468 = vmatpush.bf16.msra.mxu0 %v451
        %469 = vmatpush.bf16.msra.mxu0 %v449
        %470 = vmatpush.bf16.msra.mxu0 %v447
        %471 = vmatpush.bf16.msra.mxu0 %v445
        %472 = vmatmul.bf16.gmra.mxu0 %v462
        %v473 = vpop.f32.mrf.mxu0
        %v474 = vadd.f32 0.0, %v473
        %v475 = vpop.f32.mrf.mxu0
        %v476 = vadd.f32 0.0, %v475
        %477 = vdwg.mxu0
        %478 = vmatpush.bf16.msra.mxu0 0
        %479 = vmatpush.bf16.msra.mxu0 0
        %480 = vmatpush.bf16.msra.mxu0 0
        %481 = vmatpush.bf16.msra.mxu0 0
        %482 = vmatpush.bf16.msra.mxu0 %v452
        %483 = vmatpush.bf16.msra.mxu0 %v450
        %484 = vmatpush.bf16.msra.mxu0 %v448
        %485 = vmatpush.bf16.msra.mxu0 %v446
        %486 = vmatmul.bf16.gmra.mxu0 %v462
        %v487 = vpop.f32.mrf.mxu0
        %v488 = vadd.f32 0.0, %v487
        %v489 = vpop.f32.mrf.mxu0
        %v490 = vadd.f32 0.0, %v489
        %491 = vdwg.mxu0
        %v492 = vadd.f32 %v401, %v474
        %v493 = vadd.f32 %v402, %v488
        %v494 = vadd.f32 %v403, %v476
        %v495 = vadd.f32 %v404, %v490
        %v496 = vmax.f32 %v492, 0.0
        %v497 = vmax.f32 %v493, 0.0
        %v498 = vmax.f32 %v494, 0.0
        %v499 = vmax.f32 %v495, 0.0
        %v500 = vpack.c.bf16 %v497, %v496
        %v501 = vpack.c.bf16 %v499, %v498
        %v503 = vshrl.u32 %v500, 16
        %v505 = vrot.slane %v503, 7
        %v506 = vshll.u32 %v500, 16
        %v508 = vor.u32 %v505, %v506
        %v509 = vrot.slane %v505, 4
        %v511 = vshrl.u32 %v501, 16
        %v513 = vrot.slane %v511, 7
        %v514 = vshll.u32 %v501, 16
        %v516 = vor.u32 %v513, %v514
        %v517 = vsel %vm252, %v509, %v516
        %v518 = vrot.slane %v513, 4
        %vm522 = vcmask 1043456
        %vm523 = vmand %vm522, %vm274
        %vm524 = vcmask 1047556
        %vm525 = vsmask.f32 7954
        %vm526 = vmand %vm524, %vm525
        %vm527 = vmor %vm526, %vm523
        %v528 = vld [vmem:[#allocation3] sm:$0xff]
        %v529 = vsel %vm527, %v508, %v528
        %530 = vst [vmem:[#allocation3] sm:$0xff] %v529
        %531 = vst [vmem:[#allocation3 + $0x8] sm:$0xff] %v517
        %vm532 = vcmask 1040384
        %vm533 = vmand %vm532, %vm250
        %vm534 = vcmask 1044484
        %vm535 = vsmask.f32 4352
        %vm536 = vmand %vm534, %vm535
        %vm537 = vmor %vm536, %vm533
        %v538 = vld [vmem:[#allocation3 + $0x10] sm:$0x11]
        %v539 = vsel %vm537, %v518, %v538
        %540 = vst [vmem:[#allocation3 + $0x10] sm:$0x11] %v539
        %v541 = vld [vmem:[#allocation2] sm:$0xe]
        %v542 = vld [vmem:[#allocation2 + $0x4] sm:$0xf]
        %v543 = vld [vmem:[#allocation2 + $0x8] sm:$0x1]
        %s544 = scalar_lea.vmem %s1, 128
        %v545 = vld [vmem:[%s544] sm:$0xff]
        %v546 = vld [vmem:[%s544 + $0x8] sm:$0xff]
        %v547 = vld [vmem:[%s544 + $0x10] sm:$0xff]
        %v548 = vld [vmem:[%s544 + $0x18] sm:$0xff]
        %v549 = vld [vmem:[%s544 + $0x20] sm:$0xff]
        %v550 = vld [vmem:[%s544 + $0x28] sm:$0xff]
        %v551 = vld [vmem:[%s544 + $0x30] sm:$0xff]
        %v552 = vld [vmem:[%s544 + $0x38] sm:$0xff]
        %v556 = vunpack.c.l.b16 %v541
        %v557 = vunpack.c.l.b16 %v542
        %v558 = vunpack.c.l.b16 %v543
        %v559 = vpack.c.b16 %v557, %v556
        %v560 = vpack.c.b16 %v558, %v558
        %vm561 = vcmask 1046528
        %v562 = vrot.slane %v559, 1
        %v563 = vrot.slane %v560, 1
        %v564 = vsel %vm561, %v562, %v563
        %v573 = vunpack.c.l.b16 %v545
        %v574 = vunpack.c.h.b16 %v545
        %v575 = vunpack.c.l.b16 %v546
        %v576 = vunpack.c.h.b16 %v546
        %v577 = vunpack.c.l.b16 %v547
        %v578 = vunpack.c.h.b16 %v547
        %v579 = vunpack.c.l.b16 %v548
        %v580 = vunpack.c.h.b16 %v548
        %v581 = vunpack.c.l.b16 %v549
        %v582 = vunpack.c.h.b16 %v549
        %v583 = vunpack.c.l.b16 %v550
        %v584 = vunpack.c.h.b16 %v550
        %v585 = vunpack.c.l.b16 %v551
        %v586 = vunpack.c.h.b16 %v551
        %v587 = vunpack.c.l.b16 %v552
        %v588 = vunpack.c.h.b16 %v552
        %v589 = vpack.c.b16 %v575, %v573
        %v590 = vpack.c.b16 %v576, %v574
        %v591 = vpack.c.b16 %v579, %v577
        %v592 = vpack.c.b16 %v580, %v578
        %v593 = vpack.c.b16 %v583, %v581
        %v594 = vpack.c.b16 %v584, %v582
        %v595 = vpack.c.b16 %v587, %v585
        %v596 = vpack.c.b16 %v588, %v586
        %v606 = vsel %vm369, %v564, 0
        %608 = vmatpush.bf16.msra.mxu0 0
        %609 = vmatpush.bf16.msra.mxu0 0
        %610 = vmatpush.bf16.msra.mxu0 0
        %611 = vmatpush.bf16.msra.mxu0 0
        %612 = vmatpush.bf16.msra.mxu0 %v595
        %613 = vmatpush.bf16.msra.mxu0 %v593
        %614 = vmatpush.bf16.msra.mxu0 %v591
        %615 = vmatpush.bf16.msra.mxu0 %v589
        %616 = vmatmul.bf16.gmra.mxu0 %v606
        %v617 = vpop.f32.mrf.mxu0
        %v618 = vadd.f32 0.0, %v617
        %v619 = vpop.f32.mrf.mxu0
        %v620 = vadd.f32 0.0, %v619
        %621 = vdwg.mxu0
        %622 = vmatpush.bf16.msra.mxu0 0
        %623 = vmatpush.bf16.msra.mxu0 0
        %624 = vmatpush.bf16.msra.mxu0 0
        %625 = vmatpush.bf16.msra.mxu0 0
        %626 = vmatpush.bf16.msra.mxu0 %v596
        %627 = vmatpush.bf16.msra.mxu0 %v594
        %628 = vmatpush.bf16.msra.mxu0 %v592
        %629 = vmatpush.bf16.msra.mxu0 %v590
        %630 = vmatmul.bf16.gmra.mxu0 %v606
        %v631 = vpop.f32.mrf.mxu0
        %v632 = vadd.f32 0.0, %v631
        %v633 = vpop.f32.mrf.mxu0
        %v634 = vadd.f32 0.0, %v633
        %635 = vdwg.mxu0
        %v636 = vadd.f32 %v293, %v618
        %v637 = vadd.f32 %v294, %v632
        %v638 = vadd.f32 %v293, %v620
        %v639 = vadd.f32 %v294, %v634
        %v640 = vld [vmem:[#allocation2] sm:$0xf]
        %s641 = scalar_lea.vmem %s1, 192
        %v642 = vld [vmem:[%s641] sm:$0xff]
        %v643 = vld [vmem:[%s641 + $0x8] sm:$0xff]
        %v644 = vld [vmem:[%s641 + $0x10] sm:$0xff]
        %v645 = vld [vmem:[%s641 + $0x18] sm:$0xff]
        %v646 = vld [vmem:[%s641 + $0x20] sm:$0xff]
        %v647 = vld [vmem:[%s641 + $0x28] sm:$0xff]
        %v648 = vld [vmem:[%s641 + $0x30] sm:$0xff]
        %v649 = vld [vmem:[%s641 + $0x38] sm:$0xff]
        %v651 = vunpack.c.l.b16 %v640
        %v652 = vpack.c.b16 %v557, %v651
        %v654 = vshrl.u32 %v652, 16
        %v656 = vshll.u32 %v652, 16
        %v658 = vrot.slane %v656, 1
        %v659 = vor.u32 %v654, %v658
        %v661 = vshll.u32 %v560, 16
        %v663 = vrot.slane %v661, 1
        %v664 = vsel %vm316, %v659, %v663
        %v673 = vunpack.c.l.b16 %v642
        %v674 = vunpack.c.h.b16 %v642
        %v675 = vunpack.c.l.b16 %v643
        %v676 = vunpack.c.h.b16 %v643
        %v677 = vunpack.c.l.b16 %v644
        %v678 = vunpack.c.h.b16 %v644
        %v679 = vunpack.c.l.b16 %v645
        %v680 = vunpack.c.h.b16 %v645
        %v681 = vunpack.c.l.b16 %v646
        %v682 = vunpack.c.h.b16 %v646
        %v683 = vunpack.c.l.b16 %v647
        %v684 = vunpack.c.h.b16 %v647
        %v685 = vunpack.c.l.b16 %v648
        %v686 = vunpack.c.h.b16 %v648
        %v687 = vunpack.c.l.b16 %v649
        %v688 = vunpack.c.h.b16 %v649
        %v689 = vpack.c.b16 %v675, %v673
        %v690 = vpack.c.b16 %v676, %v674
        %v691 = vpack.c.b16 %v679, %v677
        %v692 = vpack.c.b16 %v680, %v678
        %v693 = vpack.c.b16 %v683, %v681
        %v694 = vpack.c.b16 %v684, %v682
        %v695 = vpack.c.b16 %v687, %v685
        %v696 = vpack.c.b16 %v688, %v686
        %v706 = vsel %vm369, %v664, 0
        %708 = vmatpush.bf16.msra.mxu0 0
        %709 = vmatpush.bf16.msra.mxu0 0
        %710 = vmatpush.bf16.msra.mxu0 0
        %711 = vmatpush.bf16.msra.mxu0 0
        %712 = vmatpush.bf16.msra.mxu0 %v695
        %713 = vmatpush.bf16.msra.mxu0 %v693
        %714 = vmatpush.bf16.msra.mxu0 %v691
        %715 = vmatpush.bf16.msra.mxu0 %v689
        %716 = vmatmul.bf16.gmra.mxu0 %v706
        %v717 = vpop.f32.mrf.mxu0
        %v718 = vadd.f32 0.0, %v717
        %v719 = vpop.f32.mrf.mxu0
        %v720 = vadd.f32 0.0, %v719
        %721 = vdwg.mxu0
        %722 = vmatpush.bf16.msra.mxu0 0
        %723 = vmatpush.bf16.msra.mxu0 0
        %724 = vmatpush.bf16.msra.mxu0 0
        %725 = vmatpush.bf16.msra.mxu0 0
        %726 = vmatpush.bf16.msra.mxu0 %v696
        %727 = vmatpush.bf16.msra.mxu0 %v694
        %728 = vmatpush.bf16.msra.mxu0 %v692
        %729 = vmatpush.bf16.msra.mxu0 %v690
        %730 = vmatmul.bf16.gmra.mxu0 %v706
        %v731 = vpop.f32.mrf.mxu0
        %v732 = vadd.f32 0.0, %v731
        %v733 = vpop.f32.mrf.mxu0
        %v734 = vadd.f32 0.0, %v733
        %735 = vdwg.mxu0
        %v736 = vadd.f32 %v636, %v718
        %v737 = vadd.f32 %v637, %v732
        %v738 = vadd.f32 %v638, %v720
        %v739 = vadd.f32 %v639, %v734
        %v740 = vmax.f32 %v736, 0.0
        %v741 = vmax.f32 %v737, 0.0
        %v742 = vmax.f32 %v738, 0.0
        %v743 = vmax.f32 %v739, 0.0
        %v744 = vpack.c.bf16 %v741, %v740
        %v745 = vpack.c.bf16 %v743, %v742
        %v747 = vshrl.u32 %v744, 16
        %v749 = vrot.slane %v747, 7
        %v750 = vshll.u32 %v744, 16
        %v752 = vor.u32 %v749, %v750
        %v753 = vrot.slane %v749, 4
        %v755 = vshrl.u32 %v745, 16
        %v757 = vrot.slane %v755, 7
        %v758 = vshll.u32 %v745, 16
        %v760 = vor.u32 %v757, %v758
        %v761 = vsel %vm252, %v753, %v760
        %v762 = vrot.slane %v757, 4
        %s766 = scalar_lea.vmem [#allocation3], 24
        %v767 = vld [vmem:[%s766] sm:$0xff]
        %v768 = vsel %vm527, %v752, %v767
        %769 = vst [vmem:[%s766] sm:$0xff] %v768
        %770 = vst [vmem:[%s766 + $0x8] sm:$0xff] %v761
        %v771 = vld [vmem:[%s766 + $0x10] sm:$0x11]
        %v772 = vsel %vm537, %v762, %v771
        %773 = vst [vmem:[%s766 + $0x10] sm:$0x11] %v772
        %v774 = vld [vmem:[%s4] sm:$0x3]
        %v776 = vperm.slane %v774, 0
        %v777 = vperm.slane %v774, 1
        %v780 = vld [vmem:[#allocation3] sm:$0xff]
        %v781 = vld [vmem:[#allocation3 + $0x8] sm:$0xff]
        %v782 = vld [vmem:[#allocation3 + $0x10] sm:$0x11]
        %v783 = vld [vmem:[#allocation4] sm:$0xff]
        %v784 = vld [vmem:[#allocation4 + $0x8] sm:$0xff]
        %v785 = vld [vmem:[#allocation4 + $0x10] sm:$0xff]
        %v786 = vld [vmem:[#allocation4 + $0x18] sm:$0xff]
        %v787 = vld [vmem:[#allocation4 + $0x20] sm:$0xff]
        %v788 = vld [vmem:[#allocation4 + $0x28] sm:$0xff]
        %v789 = vld [vmem:[#allocation4 + $0x30] sm:$0xff]
        %v790 = vld [vmem:[#allocation4 + $0x38] sm:$0xff]
        %v791 = vld [vmem:[#allocation4 + $0x40] sm:$0xff]
        %v792 = vld [vmem:[#allocation4 + $0x48] sm:$0xff]
        %v793 = vld [vmem:[#allocation4 + $0x50] sm:$0xff]
        %v794 = vld [vmem:[#allocation4 + $0x58] sm:$0xff]
        %v795 = vld [vmem:[#allocation4 + $0x60] sm:$0xff]
        %v796 = vld [vmem:[#allocation4 + $0x68] sm:$0xff]
        %v797 = vld [vmem:[#allocation4 + $0x70] sm:$0xff]
        %v798 = vld [vmem:[#allocation4 + $0x78] sm:$0xff]
        %v799 = vld [vmem:[#allocation4 + $0x80] sm:$0xff]
        %v800 = vld [vmem:[#allocation4 + $0x88] sm:$0xff]
        %v801 = vld [vmem:[#allocation4 + $0x90] sm:$0xff]
        %v802 = vld [vmem:[#allocation4 + $0x98] sm:$0xff]
        %v803 = vld [vmem:[#allocation4 + $0xa0] sm:$0xff]
        %v804 = vld [vmem:[#allocation4 + $0xa8] sm:$0xff]
        %v805 = vld [vmem:[#allocation4 + $0xb0] sm:$0xff]
        %v806 = vld [vmem:[#allocation4 + $0xb8] sm:$0xff]
        %v807 = vld [vmem:[#allocation4 + $0xc0] sm:$0xff]
        %v808 = vld [vmem:[#allocation4 + $0xc8] sm:$0xff]
        %v809 = vld [vmem:[#allocation4 + $0xd0] sm:$0xff]
        %v810 = vld [vmem:[#allocation4 + $0xd8] sm:$0xff]
        %v811 = vld [vmem:[#allocation4 + $0xe0] sm:$0xff]
        %v812 = vld [vmem:[#allocation4 + $0xe8] sm:$0xff]
        %v813 = vld [vmem:[#allocation4 + $0xf0] sm:$0xff]
        %v814 = vld [vmem:[#allocation4 + $0xf8] sm:$0xff]
        %v818 = vunpack.c.l.b16 %v780
        %v819 = vunpack.c.h.b16 %v780
        %v820 = vunpack.c.l.b16 %v781
        %v821 = vunpack.c.h.b16 %v781
        %v822 = vunpack.c.l.b16 %v782
        %v823 = vunpack.c.h.b16 %v782
        %v824 = vpack.c.b16 %v820, %v818
        %v825 = vpack.c.b16 %v821, %v819
        %v826 = vpack.c.b16 %v822, %v822
        %v827 = vpack.c.b16 %v823, %v823
        %v829 = vshrl.u32 %v824, 16
        %v831 = vshll.u32 %v824, 16
        %v833 = vrot.slane %v831, 1
        %v834 = vor.u32 %v829, %v833
        %v836 = vshll.u32 %v826, 16
        %v838 = vrot.slane %v836, 1
        %v839 = vsel %vm316, %v834, %v838
        %v841 = vshrl.u32 %v825, 16
        %v843 = vshll.u32 %v825, 16
        %v845 = vrot.slane %v843, 1
        %v846 = vor.u32 %v841, %v845
        %v848 = vshll.u32 %v827, 16
        %v850 = vrot.slane %v848, 1
        %v851 = vsel %vm316, %v846, %v850
        %v886 = vunpack.c.l.b16 %v783
        %v887 = vunpack.c.h.b16 %v783
        %v888 = vunpack.c.l.b16 %v784
        %v889 = vunpack.c.h.b16 %v784
        %v890 = vunpack.c.l.b16 %v785
        %v891 = vunpack.c.h.b16 %v785
        %v892 = vunpack.c.l.b16 %v786
        %v893 = vunpack.c.h.b16 %v786
        %v894 = vunpack.c.l.b16 %v787
        %v895 = vunpack.c.h.b16 %v787
        %v896 = vunpack.c.l.b16 %v788
        %v897 = vunpack.c.h.b16 %v788
        %v898 = vunpack.c.l.b16 %v789
        %v899 = vunpack.c.h.b16 %v789
        %v900 = vunpack.c.l.b16 %v790
        %v901 = vunpack.c.h.b16 %v790
        %v902 = vunpack.c.l.b16 %v791
        %v903 = vunpack.c.h.b16 %v791
        %v904 = vunpack.c.l.b16 %v792
        %v905 = vunpack.c.h.b16 %v792
        %v906 = vunpack.c.l.b16 %v793
        %v907 = vunpack.c.h.b16 %v793
        %v908 = vunpack.c.l.b16 %v794
        %v909 = vunpack.c.h.b16 %v794
        %v910 = vunpack.c.l.b16 %v795
        %v911 = vunpack.c.h.b16 %v795
        %v912 = vunpack.c.l.b16 %v796
        %v913 = vunpack.c.h.b16 %v796
        %v914 = vunpack.c.l.b16 %v797
        %v915 = vunpack.c.h.b16 %v797
        %v916 = vunpack.c.l.b16 %v798
        %v917 = vunpack.c.h.b16 %v798
        %v918 = vunpack.c.l.b16 %v799
        %v919 = vunpack.c.h.b16 %v799
        %v920 = vunpack.c.l.b16 %v800
        %v921 = vunpack.c.h.b16 %v800
        %v922 = vunpack.c.l.b16 %v801
        %v923 = vunpack.c.h.b16 %v801
        %v924 = vunpack.c.l.b16 %v802
        %v925 = vunpack.c.h.b16 %v802
        %v926 = vunpack.c.l.b16 %v803
        %v927 = vunpack.c.h.b16 %v803
        %v928 = vunpack.c.l.b16 %v804
        %v929 = vunpack.c.h.b16 %v804
        %v930 = vunpack.c.l.b16 %v805
        %v931 = vunpack.c.h.b16 %v805
        %v932 = vunpack.c.l.b16 %v806
        %v933 = vunpack.c.h.b16 %v806
        %v934 = vunpack.c.l.b16 %v807
        %v935 = vunpack.c.h.b16 %v807
        %v936 = vunpack.c.l.b16 %v808
        %v937 = vunpack.c.h.b16 %v808
        %v938 = vunpack.c.l.b16 %v809
        %v939 = vunpack.c.h.b16 %v809
        %v940 = vunpack.c.l.b16 %v810
        %v941 = vunpack.c.h.b16 %v810
        %v942 = vunpack.c.l.b16 %v811
        %v943 = vunpack.c.h.b16 %v811
        %v944 = vunpack.c.l.b16 %v812
        %v945 = vunpack.c.h.b16 %v812
        %v946 = vunpack.c.l.b16 %v813
        %v947 = vunpack.c.h.b16 %v813
        %v948 = vunpack.c.l.b16 %v814
        %v949 = vunpack.c.h.b16 %v814
        %v950 = vpack.c.b16 %v888, %v886
        %v951 = vpack.c.b16 %v889, %v887
        %v952 = vpack.c.b16 %v892, %v890
        %v953 = vpack.c.b16 %v893, %v891
        %v954 = vpack.c.b16 %v896, %v894
        %v955 = vpack.c.b16 %v897, %v895
        %v956 = vpack.c.b16 %v900, %v898
        %v957 = vpack.c.b16 %v901, %v899
        %v958 = vpack.c.b16 %v904, %v902
        %v959 = vpack.c.b16 %v905, %v903
        %v960 = vpack.c.b16 %v908, %v906
        %v961 = vpack.c.b16 %v909, %v907
        %v962 = vpack.c.b16 %v912, %v910
        %v963 = vpack.c.b16 %v913, %v911
        %v964 = vpack.c.b16 %v916, %v914
        %v965 = vpack.c.b16 %v917, %v915
        %v966 = vpack.c.b16 %v920, %v918
        %v967 = vpack.c.b16 %v921, %v919
        %v968 = vpack.c.b16 %v924, %v922
        %v969 = vpack.c.b16 %v925, %v923
        %v970 = vpack.c.b16 %v928, %v926
        %v971 = vpack.c.b16 %v929, %v927
        %v972 = vpack.c.b16 %v932, %v930
        %v973 = vpack.c.b16 %v933, %v931
        %v974 = vpack.c.b16 %v936, %v934
        %v975 = vpack.c.b16 %v937, %v935
        %v976 = vpack.c.b16 %v940, %v938
        %v977 = vpack.c.b16 %v941, %v939
        %v978 = vpack.c.b16 %v944, %v942
        %v979 = vpack.c.b16 %v945, %v943
        %v980 = vpack.c.b16 %v948, %v946
        %v981 = vpack.c.b16 %v949, %v947
        %1014 = vmatpush.bf16.msra.mxu0 %v964
        %1015 = vmatpush.bf16.msra.mxu0 %v962
        %1016 = vmatpush.bf16.msra.mxu0 %v960
        %1017 = vmatpush.bf16.msra.mxu0 %v958
        %1018 = vmatpush.bf16.msra.mxu0 %v956
        %1019 = vmatpush.bf16.msra.mxu0 %v954
        %1020 = vmatpush.bf16.msra.mxu0 %v952
        %1021 = vmatpush.bf16.msra.mxu0 %v950
        %1022 = vmatmul.bf16.gmra.mxu0 %v839
        %v1023 = vpop.f32.mrf.mxu0
        %v1024 = vadd.f32 0.0, %v1023
        %v1025 = vpop.f32.mrf.mxu0
        %v1026 = vadd.f32 0.0, %v1025
        %1027 = vdwg.mxu0
        %1028 = vmatpush.bf16.msra.mxu0 %v980
        %1029 = vmatpush.bf16.msra.mxu0 %v978
        %1030 = vmatpush.bf16.msra.mxu0 %v976
        %1031 = vmatpush.bf16.msra.mxu0 %v974
        %1032 = vmatpush.bf16.msra.mxu0 %v972
        %1033 = vmatpush.bf16.msra.mxu0 %v970
        %1034 = vmatpush.bf16.msra.mxu0 %v968
        %1035 = vmatpush.bf16.msra.mxu0 %v966
        %1036 = vmatmul.bf16.gmra.mxu0 %v851
        %v1037 = vpop.f32.mrf.mxu0
        %v1038 = vadd.f32 %v1024, %v1037
        %v1039 = vpop.f32.mrf.mxu0
        %v1040 = vadd.f32 %v1026, %v1039
        %1041 = vdwg.mxu0
        %1042 = vmatpush.bf16.msra.mxu0 %v965
        %1043 = vmatpush.bf16.msra.mxu0 %v963
        %1044 = vmatpush.bf16.msra.mxu0 %v961
        %1045 = vmatpush.bf16.msra.mxu0 %v959
        %1046 = vmatpush.bf16.msra.mxu0 %v957
        %1047 = vmatpush.bf16.msra.mxu0 %v955
        %1048 = vmatpush.bf16.msra.mxu0 %v953
        %1049 = vmatpush.bf16.msra.mxu0 %v951
        %1050 = vmatmul.bf16.gmra.mxu0 %v839
        %v1051 = vpop.f32.mrf.mxu0
        %v1052 = vadd.f32 0.0, %v1051
        %v1053 = vpop.f32.mrf.mxu0
        %v1054 = vadd.f32 0.0, %v1053
        %1055 = vdwg.mxu0
        %1056 = vmatpush.bf16.msra.mxu0 %v981
        %1057 = vmatpush.bf16.msra.mxu0 %v979
        %1058 = vmatpush.bf16.msra.mxu0 %v977
        %1059 = vmatpush.bf16.msra.mxu0 %v975
        %1060 = vmatpush.bf16.msra.mxu0 %v973
        %1061 = vmatpush.bf16.msra.mxu0 %v971
        %1062 = vmatpush.bf16.msra.mxu0 %v969
        %1063 = vmatpush.bf16.msra.mxu0 %v967
        %1064 = vmatmul.bf16.gmra.mxu0 %v851
        %v1065 = vpop.f32.mrf.mxu0
        %v1066 = vadd.f32 %v1052, %v1065
        %v1067 = vpop.f32.mrf.mxu0
        %v1068 = vadd.f32 %v1054, %v1067
        %1069 = vdwg.mxu0
        %v1070 = vadd.f32 %v776, %v1038
        %v1071 = vadd.f32 %v777, %v1066
        %v1072 = vadd.f32 %v776, %v1040
        %v1073 = vadd.f32 %v777, %v1068
        %v1074 = vld [vmem:[%s766] sm:$0xff]
        %v1075 = vld [vmem:[%s766 + $0x8] sm:$0xff]
        %s1076 = scalar_lea.vmem [#allocation4], 256
        %v1077 = vld [vmem:[%s1076] sm:$0xff]
        %v1078 = vld [vmem:[%s1076 + $0x8] sm:$0xff]
        %v1079 = vld [vmem:[%s1076 + $0x10] sm:$0xff]
        %v1080 = vld [vmem:[%s1076 + $0x18] sm:$0xff]
        %v1081 = vld [vmem:[%s1076 + $0x20] sm:$0xff]
        %v1082 = vld [vmem:[%s1076 + $0x28] sm:$0xff]
        %v1083 = vld [vmem:[%s1076 + $0x30] sm:$0xff]
        %v1084 = vld [vmem:[%s1076 + $0x38] sm:$0xff]
        %v1085 = vld [vmem:[%s1076 + $0x40] sm:$0xff]
        %v1086 = vld [vmem:[%s1076 + $0x48] sm:$0xff]
        %v1087 = vld [vmem:[%s1076 + $0x50] sm:$0xff]
        %v1088 = vld [vmem:[%s1076 + $0x58] sm:$0xff]
        %v1089 = vld [vmem:[%s1076 + $0x60] sm:$0xff]
        %v1090 = vld [vmem:[%s1076 + $0x68] sm:$0xff]
        %v1091 = vld [vmem:[%s1076 + $0x70] sm:$0xff]
        %v1092 = vld [vmem:[%s1076 + $0x78] sm:$0xff]
        %v1093 = vld [vmem:[%s1076 + $0x80] sm:$0xff]
        %v1094 = vld [vmem:[%s1076 + $0x88] sm:$0xff]
        %v1095 = vld [vmem:[%s1076 + $0x90] sm:$0xff]
        %v1096 = vld [vmem:[%s1076 + $0x98] sm:$0xff]
        %v1097 = vld [vmem:[%s1076 + $0xa0] sm:$0xff]
        %v1098 = vld [vmem:[%s1076 + $0xa8] sm:$0xff]
        %v1099 = vld [vmem:[%s1076 + $0xb0] sm:$0xff]
        %v1100 = vld [vmem:[%s1076 + $0xb8] sm:$0xff]
        %v1101 = vld [vmem:[%s1076 + $0xc0] sm:$0xff]
        %v1102 = vld [vmem:[%s1076 + $0xc8] sm:$0xff]
        %v1103 = vld [vmem:[%s1076 + $0xd0] sm:$0xff]
        %v1104 = vld [vmem:[%s1076 + $0xd8] sm:$0xff]
        %v1105 = vld [vmem:[%s1076 + $0xe0] sm:$0xff]
        %v1106 = vld [vmem:[%s1076 + $0xe8] sm:$0xff]
        %v1107 = vld [vmem:[%s1076 + $0xf0] sm:$0xff]
        %v1108 = vld [vmem:[%s1076 + $0xf8] sm:$0xff]
        %v1111 = vunpack.c.l.b16 %v1074
        %v1112 = vunpack.c.h.b16 %v1074
        %v1113 = vunpack.c.l.b16 %v1075
        %v1114 = vunpack.c.h.b16 %v1075
        %v1115 = vpack.c.b16 %v1113, %v1111
        %v1116 = vpack.c.b16 %v1114, %v1112
        %v1151 = vunpack.c.l.b16 %v1077
        %v1152 = vunpack.c.h.b16 %v1077
        %v1153 = vunpack.c.l.b16 %v1078
        %v1154 = vunpack.c.h.b16 %v1078
        %v1155 = vunpack.c.l.b16 %v1079
        %v1156 = vunpack.c.h.b16 %v1079
        %v1157 = vunpack.c.l.b16 %v1080
        %v1158 = vunpack.c.h.b16 %v1080
        %v1159 = vunpack.c.l.b16 %v1081
        %v1160 = vunpack.c.h.b16 %v1081
        %v1161 = vunpack.c.l.b16 %v1082
        %v1162 = vunpack.c.h.b16 %v1082
        %v1163 = vunpack.c.l.b16 %v1083
        %v1164 = vunpack.c.h.b16 %v1083
        %v1165 = vunpack.c.l.b16 %v1084
        %v1166 = vunpack.c.h.b16 %v1084
        %v1167 = vunpack.c.l.b16 %v1085
        %v1168 = vunpack.c.h.b16 %v1085
        %v1169 = vunpack.c.l.b16 %v1086
        %v1170 = vunpack.c.h.b16 %v1086
        %v1171 = vunpack.c.l.b16 %v1087
        %v1172 = vunpack.c.h.b16 %v1087
        %v1173 = vunpack.c.l.b16 %v1088
        %v1174 = vunpack.c.h.b16 %v1088
        %v1175 = vunpack.c.l.b16 %v1089
        %v1176 = vunpack.c.h.b16 %v1089
        %v1177 = vunpack.c.l.b16 %v1090
        %v1178 = vunpack.c.h.b16 %v1090
        %v1179 = vunpack.c.l.b16 %v1091
        %v1180 = vunpack.c.h.b16 %v1091
        %v1181 = vunpack.c.l.b16 %v1092
        %v1182 = vunpack.c.h.b16 %v1092
        %v1183 = vunpack.c.l.b16 %v1093
        %v1184 = vunpack.c.h.b16 %v1093
        %v1185 = vunpack.c.l.b16 %v1094
        %v1186 = vunpack.c.h.b16 %v1094
        %v1187 = vunpack.c.l.b16 %v1095
        %v1188 = vunpack.c.h.b16 %v1095
        %v1189 = vunpack.c.l.b16 %v1096
        %v1190 = vunpack.c.h.b16 %v1096
        %v1191 = vunpack.c.l.b16 %v1097
        %v1192 = vunpack.c.h.b16 %v1097
        %v1193 = vunpack.c.l.b16 %v1098
        %v1194 = vunpack.c.h.b16 %v1098
        %v1195 = vunpack.c.l.b16 %v1099
        %v1196 = vunpack.c.h.b16 %v1099
        %v1197 = vunpack.c.l.b16 %v1100
        %v1198 = vunpack.c.h.b16 %v1100
        %v1199 = vunpack.c.l.b16 %v1101
        %v1200 = vunpack.c.h.b16 %v1101
        %v1201 = vunpack.c.l.b16 %v1102
        %v1202 = vunpack.c.h.b16 %v1102
        %v1203 = vunpack.c.l.b16 %v1103
        %v1204 = vunpack.c.h.b16 %v1103
        %v1205 = vunpack.c.l.b16 %v1104
        %v1206 = vunpack.c.h.b16 %v1104
        %v1207 = vunpack.c.l.b16 %v1105
        %v1208 = vunpack.c.h.b16 %v1105
        %v1209 = vunpack.c.l.b16 %v1106
        %v1210 = vunpack.c.h.b16 %v1106
        %v1211 = vunpack.c.l.b16 %v1107
        %v1212 = vunpack.c.h.b16 %v1107
        %v1213 = vunpack.c.l.b16 %v1108
        %v1214 = vunpack.c.h.b16 %v1108
        %v1215 = vpack.c.b16 %v1153, %v1151
        %v1216 = vpack.c.b16 %v1154, %v1152
        %v1217 = vpack.c.b16 %v1157, %v1155
        %v1218 = vpack.c.b16 %v1158, %v1156
        %v1219 = vpack.c.b16 %v1161, %v1159
        %v1220 = vpack.c.b16 %v1162, %v1160
        %v1221 = vpack.c.b16 %v1165, %v1163
        %v1222 = vpack.c.b16 %v1166, %v1164
        %v1223 = vpack.c.b16 %v1169, %v1167
        %v1224 = vpack.c.b16 %v1170, %v1168
        %v1225 = vpack.c.b16 %v1173, %v1171
        %v1226 = vpack.c.b16 %v1174, %v1172
        %v1227 = vpack.c.b16 %v1177, %v1175
        %v1228 = vpack.c.b16 %v1178, %v1176
        %v1229 = vpack.c.b16 %v1181, %v1179
        %v1230 = vpack.c.b16 %v1182, %v1180
        %v1231 = vpack.c.b16 %v1185, %v1183
        %v1232 = vpack.c.b16 %v1186, %v1184
        %v1233 = vpack.c.b16 %v1189, %v1187
        %v1234 = vpack.c.b16 %v1190, %v1188
        %v1235 = vpack.c.b16 %v1193, %v1191
        %v1236 = vpack.c.b16 %v1194, %v1192
        %v1237 = vpack.c.b16 %v1197, %v1195
        %v1238 = vpack.c.b16 %v1198, %v1196
        %v1239 = vpack.c.b16 %v1201, %v1199
        %v1240 = vpack.c.b16 %v1202, %v1200
        %v1241 = vpack.c.b16 %v1205, %v1203
        %v1242 = vpack.c.b16 %v1206, %v1204
        %v1243 = vpack.c.b16 %v1209, %v1207
        %v1244 = vpack.c.b16 %v1210, %v1208
        %v1245 = vpack.c.b16 %v1213, %v1211
        %v1246 = vpack.c.b16 %v1214, %v1212
        %1279 = vmatpush.bf16.msra.mxu0 %v1229
        %1280 = vmatpush.bf16.msra.mxu0 %v1227
        %1281 = vmatpush.bf16.msra.mxu0 %v1225
        %1282 = vmatpush.bf16.msra.mxu0 %v1223
        %1283 = vmatpush.bf16.msra.mxu0 %v1221
        %1284 = vmatpush.bf16.msra.mxu0 %v1219
        %1285 = vmatpush.bf16.msra.mxu0 %v1217
        %1286 = vmatpush.bf16.msra.mxu0 %v1215
        %1287 = vmatmul.bf16.gmra.mxu0 %v1115
        %v1288 = vpop.f32.mrf.mxu0
        %v1289 = vadd.f32 0.0, %v1288
        %v1290 = vpop.f32.mrf.mxu0
        %v1291 = vadd.f32 0.0, %v1290
        %1292 = vdwg.mxu0
        %1293 = vmatpush.bf16.msra.mxu0 %v1245
        %1294 = vmatpush.bf16.msra.mxu0 %v1243
        %1295 = vmatpush.bf16.msra.mxu0 %v1241
        %1296 = vmatpush.bf16.msra.mxu0 %v1239
        %1297 = vmatpush.bf16.msra.mxu0 %v1237
        %1298 = vmatpush.bf16.msra.mxu0 %v1235
        %1299 = vmatpush.bf16.msra.mxu0 %v1233
        %1300 = vmatpush.bf16.msra.mxu0 %v1231
        %1301 = vmatmul.bf16.gmra.mxu0 %v1116
        %v1302 = vpop.f32.mrf.mxu0
        %v1303 = vadd.f32 %v1289, %v1302
        %v1304 = vpop.f32.mrf.mxu0
        %v1305 = vadd.f32 %v1291, %v1304
        %1306 = vdwg.mxu0
        %1307 = vmatpush.bf16.msra.mxu0 %v1230
        %1308 = vmatpush.bf16.msra.mxu0 %v1228
        %1309 = vmatpush.bf16.msra.mxu0 %v1226
        %1310 = vmatpush.bf16.msra.mxu0 %v1224
        %1311 = vmatpush.bf16.msra.mxu0 %v1222
        %1312 = vmatpush.bf16.msra.mxu0 %v1220
        %1313 = vmatpush.bf16.msra.mxu0 %v1218
        %1314 = vmatpush.bf16.msra.mxu0 %v1216
        %1315 = vmatmul.bf16.gmra.mxu0 %v1115
        %v1316 = vpop.f32.mrf.mxu0
        %v1317 = vadd.f32 0.0, %v1316
        %v1318 = vpop.f32.mrf.mxu0
        %v1319 = vadd.f32 0.0, %v1318
        %1320 = vdwg.mxu0
        %1321 = vmatpush.bf16.msra.mxu0 %v1246
        %1322 = vmatpush.bf16.msra.mxu0 %v1244
        %1323 = vmatpush.bf16.msra.mxu0 %v1242
        %1324 = vmatpush.bf16.msra.mxu0 %v1240
        %1325 = vmatpush.bf16.msra.mxu0 %v1238
        %1326 = vmatpush.bf16.msra.mxu0 %v1236
        %1327 = vmatpush.bf16.msra.mxu0 %v1234
        %1328 = vmatpush.bf16.msra.mxu0 %v1232
        %1329 = vmatmul.bf16.gmra.mxu0 %v1116
        %v1330 = vpop.f32.mrf.mxu0
        %v1331 = vadd.f32 %v1317, %v1330
        %v1332 = vpop.f32.mrf.mxu0
        %v1333 = vadd.f32 %v1319, %v1332
        %1334 = vdwg.mxu0
        %v1335 = vadd.f32 %v1070, %v1303
        %v1336 = vadd.f32 %v1071, %v1331
        %v1337 = vadd.f32 %v1072, %v1305
        %v1338 = vadd.f32 %v1073, %v1333
        %v1339 = vmax.f32 %v1335, 0.0
        %v1340 = vmax.f32 %v1336, 0.0
        %v1341 = vmax.f32 %v1337, 0.0
        %v1342 = vmax.f32 %v1338, 0.0
        %1343 = vst [vmem:[%s241] sm:$0xff] %v1339
        %1344 = vst [vmem:[%s241 + $0x8] sm:$0xff] %v1340
        %1345 = vst [vmem:[%s241 + $0x10] sm:$0xff] %v1341
        %1346 = vst [vmem:[%s241 + $0x18] sm:$0xff] %v1342
        %v1347 = vld [vmem:[%s766] sm:$0xff]
        %v1348 = vld [vmem:[%s766 + $0x8] sm:$0xff]
        %v1349 = vld [vmem:[%s766 + $0x10] sm:$0x11]
        %s1350 = scalar_lea.vmem [#allocation4], 512
        %v1351 = vld [vmem:[%s1350] sm:$0xff]
        %v1352 = vld [vmem:[%s1350 + $0x8] sm:$0xff]
        %v1353 = vld [vmem:[%s1350 + $0x10] sm:$0xff]
        %v1354 = vld [vmem:[%s1350 + $0x18] sm:$0xff]
        %v1355 = vld [vmem:[%s1350 + $0x20] sm:$0xff]
        %v1356 = vld [vmem:[%s1350 + $0x28] sm:$0xff]
        %v1357 = vld [vmem:[%s1350 + $0x30] sm:$0xff]
        %v1358 = vld [vmem:[%s1350 + $0x38] sm:$0xff]
        %v1359 = vld [vmem:[%s1350 + $0x40] sm:$0xff]
        %v1360 = vld [vmem:[%s1350 + $0x48] sm:$0xff]
        %v1361 = vld [vmem:[%s1350 + $0x50] sm:$0xff]
        %v1362 = vld [vmem:[%s1350 + $0x58] sm:$0xff]
        %v1363 = vld [vmem:[%s1350 + $0x60] sm:$0xff]
        %v1364 = vld [vmem:[%s1350 + $0x68] sm:$0xff]
        %v1365 = vld [vmem:[%s1350 + $0x70] sm:$0xff]
        %v1366 = vld [vmem:[%s1350 + $0x78] sm:$0xff]
        %v1367 = vld [vmem:[%s1350 + $0x80] sm:$0xff]
        %v1368 = vld [vmem:[%s1350 + $0x88] sm:$0xff]
        %v1369 = vld [vmem:[%s1350 + $0x90] sm:$0xff]
        %v1370 = vld [vmem:[%s1350 + $0x98] sm:$0xff]
        %v1371 = vld [vmem:[%s1350 + $0xa0] sm:$0xff]
        %v1372 = vld [vmem:[%s1350 + $0xa8] sm:$0xff]
        %v1373 = vld [vmem:[%s1350 + $0xb0] sm:$0xff]
        %v1374 = vld [vmem:[%s1350 + $0xb8] sm:$0xff]
        %v1375 = vld [vmem:[%s1350 + $0xc0] sm:$0xff]
        %v1376 = vld [vmem:[%s1350 + $0xc8] sm:$0xff]
        %v1377 = vld [vmem:[%s1350 + $0xd0] sm:$0xff]
        %v1378 = vld [vmem:[%s1350 + $0xd8] sm:$0xff]
        %v1379 = vld [vmem:[%s1350 + $0xe0] sm:$0xff]
        %v1380 = vld [vmem:[%s1350 + $0xe8] sm:$0xff]
        %v1381 = vld [vmem:[%s1350 + $0xf0] sm:$0xff]
        %v1382 = vld [vmem:[%s1350 + $0xf8] sm:$0xff]
        %v1386 = vunpack.c.l.b16 %v1347
        %v1387 = vunpack.c.h.b16 %v1347
        %v1388 = vunpack.c.l.b16 %v1348
        %v1389 = vunpack.c.h.b16 %v1348
        %v1390 = vunpack.c.l.b16 %v1349
        %v1391 = vunpack.c.h.b16 %v1349
        %v1392 = vpack.c.b16 %v1388, %v1386
        %v1393 = vpack.c.b16 %v1389, %v1387
        %v1394 = vpack.c.b16 %v1390, %v1390
        %v1395 = vpack.c.b16 %v1391, %v1391
        %v1397 = vshrl.u32 %v1392, 16
        %v1399 = vshll.u32 %v1392, 16
        %v1401 = vrot.slane %v1399, 1
        %v1402 = vor.u32 %v1397, %v1401
        %v1404 = vshll.u32 %v1394, 16
        %v1406 = vrot.slane %v1404, 1
        %v1407 = vsel %vm316, %v1402, %v1406
        %v1409 = vshrl.u32 %v1393, 16
        %v1411 = vshll.u32 %v1393, 16
        %v1413 = vrot.slane %v1411, 1
        %v1414 = vor.u32 %v1409, %v1413
        %v1416 = vshll.u32 %v1395, 16
        %v1418 = vrot.slane %v1416, 1
        %v1419 = vsel %vm316, %v1414, %v1418
        %v1454 = vunpack.c.l.b16 %v1351
        %v1455 = vunpack.c.h.b16 %v1351
        %v1456 = vunpack.c.l.b16 %v1352
        %v1457 = vunpack.c.h.b16 %v1352
        %v1458 = vunpack.c.l.b16 %v1353
        %v1459 = vunpack.c.h.b16 %v1353
        %v1460 = vunpack.c.l.b16 %v1354
        %v1461 = vunpack.c.h.b16 %v1354
        %v1462 = vunpack.c.l.b16 %v1355
        %v1463 = vunpack.c.h.b16 %v1355
        %v1464 = vunpack.c.l.b16 %v1356
        %v1465 = vunpack.c.h.b16 %v1356
        %v1466 = vunpack.c.l.b16 %v1357
        %v1467 = vunpack.c.h.b16 %v1357
        %v1468 = vunpack.c.l.b16 %v1358
        %v1469 = vunpack.c.h.b16 %v1358
        %v1470 = vunpack.c.l.b16 %v1359
        %v1471 = vunpack.c.h.b16 %v1359
        %v1472 = vunpack.c.l.b16 %v1360
        %v1473 = vunpack.c.h.b16 %v1360
        %v1474 = vunpack.c.l.b16 %v1361
        %v1475 = vunpack.c.h.b16 %v1361
        %v1476 = vunpack.c.l.b16 %v1362
        %v1477 = vunpack.c.h.b16 %v1362
        %v1478 = vunpack.c.l.b16 %v1363
        %v1479 = vunpack.c.h.b16 %v1363
        %v1480 = vunpack.c.l.b16 %v1364
        %v1481 = vunpack.c.h.b16 %v1364
        %v1482 = vunpack.c.l.b16 %v1365
        %v1483 = vunpack.c.h.b16 %v1365
        %v1484 = vunpack.c.l.b16 %v1366
        %v1485 = vunpack.c.h.b16 %v1366
        %v1486 = vunpack.c.l.b16 %v1367
        %v1487 = vunpack.c.h.b16 %v1367
        %v1488 = vunpack.c.l.b16 %v1368
        %v1489 = vunpack.c.h.b16 %v1368
        %v1490 = vunpack.c.l.b16 %v1369
        %v1491 = vunpack.c.h.b16 %v1369
        %v1492 = vunpack.c.l.b16 %v1370
        %v1493 = vunpack.c.h.b16 %v1370
        %v1494 = vunpack.c.l.b16 %v1371
        %v1495 = vunpack.c.h.b16 %v1371
        %v1496 = vunpack.c.l.b16 %v1372
        %v1497 = vunpack.c.h.b16 %v1372
        %v1498 = vunpack.c.l.b16 %v1373
        %v1499 = vunpack.c.h.b16 %v1373
        %v1500 = vunpack.c.l.b16 %v1374
        %v1501 = vunpack.c.h.b16 %v1374
        %v1502 = vunpack.c.l.b16 %v1375
        %v1503 = vunpack.c.h.b16 %v1375
        %v1504 = vunpack.c.l.b16 %v1376
        %v1505 = vunpack.c.h.b16 %v1376
        %v1506 = vunpack.c.l.b16 %v1377
        %v1507 = vunpack.c.h.b16 %v1377
        %v1508 = vunpack.c.l.b16 %v1378
        %v1509 = vunpack.c.h.b16 %v1378
        %v1510 = vunpack.c.l.b16 %v1379
        %v1511 = vunpack.c.h.b16 %v1379
        %v1512 = vunpack.c.l.b16 %v1380
        %v1513 = vunpack.c.h.b16 %v1380
        %v1514 = vunpack.c.l.b16 %v1381
        %v1515 = vunpack.c.h.b16 %v1381
        %v1516 = vunpack.c.l.b16 %v1382
        %v1517 = vunpack.c.h.b16 %v1382
        %v1518 = vpack.c.b16 %v1456, %v1454
        %v1519 = vpack.c.b16 %v1457, %v1455
        %v1520 = vpack.c.b16 %v1460, %v1458
        %v1521 = vpack.c.b16 %v1461, %v1459
        %v1522 = vpack.c.b16 %v1464, %v1462
        %v1523 = vpack.c.b16 %v1465, %v1463
        %v1524 = vpack.c.b16 %v1468, %v1466
        %v1525 = vpack.c.b16 %v1469, %v1467
        %v1526 = vpack.c.b16 %v1472, %v1470
        %v1527 = vpack.c.b16 %v1473, %v1471
        %v1528 = vpack.c.b16 %v1476, %v1474
        %v1529 = vpack.c.b16 %v1477, %v1475
        %v1530 = vpack.c.b16 %v1480, %v1478
        %v1531 = vpack.c.b16 %v1481, %v1479
        %v1532 = vpack.c.b16 %v1484, %v1482
        %v1533 = vpack.c.b16 %v1485, %v1483
        %v1534 = vpack.c.b16 %v1488, %v1486
        %v1535 = vpack.c.b16 %v1489, %v1487
        %v1536 = vpack.c.b16 %v1492, %v1490
        %v1537 = vpack.c.b16 %v1493, %v1491
        %v1538 = vpack.c.b16 %v1496, %v1494
        %v1539 = vpack.c.b16 %v1497, %v1495
        %v1540 = vpack.c.b16 %v1500, %v1498
        %v1541 = vpack.c.b16 %v1501, %v1499
        %v1542 = vpack.c.b16 %v1504, %v1502
        %v1543 = vpack.c.b16 %v1505, %v1503
        %v1544 = vpack.c.b16 %v1508, %v1506
        %v1545 = vpack.c.b16 %v1509, %v1507
        %v1546 = vpack.c.b16 %v1512, %v1510
        %v1547 = vpack.c.b16 %v1513, %v1511
        %v1548 = vpack.c.b16 %v1516, %v1514
        %v1549 = vpack.c.b16 %v1517, %v1515
        %1582 = vmatpush.bf16.msra.mxu0 %v1532
        %1583 = vmatpush.bf16.msra.mxu0 %v1530
        %1584 = vmatpush.bf16.msra.mxu0 %v1528
        %1585 = vmatpush.bf16.msra.mxu0 %v1526
        %1586 = vmatpush.bf16.msra.mxu0 %v1524
        %1587 = vmatpush.bf16.msra.mxu0 %v1522
        %1588 = vmatpush.bf16.msra.mxu0 %v1520
        %1589 = vmatpush.bf16.msra.mxu0 %v1518
        %1590 = vmatmul.bf16.gmra.mxu0 %v1407
        %v1591 = vpop.f32.mrf.mxu0
        %v1592 = vadd.f32 0.0, %v1591
        %v1593 = vpop.f32.mrf.mxu0
        %v1594 = vadd.f32 0.0, %v1593
        %1595 = vdwg.mxu0
        %1596 = vmatpush.bf16.msra.mxu0 %v1548
        %1597 = vmatpush.bf16.msra.mxu0 %v1546
        %1598 = vmatpush.bf16.msra.mxu0 %v1544
        %1599 = vmatpush.bf16.msra.mxu0 %v1542
        %1600 = vmatpush.bf16.msra.mxu0 %v1540
        %1601 = vmatpush.bf16.msra.mxu0 %v1538
        %1602 = vmatpush.bf16.msra.mxu0 %v1536
        %1603 = vmatpush.bf16.msra.mxu0 %v1534
        %1604 = vmatmul.bf16.gmra.mxu0 %v1419
        %v1605 = vpop.f32.mrf.mxu0
        %v1606 = vadd.f32 %v1592, %v1605
        %v1607 = vpop.f32.mrf.mxu0
        %v1608 = vadd.f32 %v1594, %v1607
        %1609 = vdwg.mxu0
        %1610 = vmatpush.bf16.msra.mxu0 %v1533
        %1611 = vmatpush.bf16.msra.mxu0 %v1531
        %1612 = vmatpush.bf16.msra.mxu0 %v1529
        %1613 = vmatpush.bf16.msra.mxu0 %v1527
        %1614 = vmatpush.bf16.msra.mxu0 %v1525
        %1615 = vmatpush.bf16.msra.mxu0 %v1523
        %1616 = vmatpush.bf16.msra.mxu0 %v1521
        %1617 = vmatpush.bf16.msra.mxu0 %v1519
        %1618 = vmatmul.bf16.gmra.mxu0 %v1407
        %v1619 = vpop.f32.mrf.mxu0
        %v1620 = vadd.f32 0.0, %v1619
        %v1621 = vpop.f32.mrf.mxu0
        %v1622 = vadd.f32 0.0, %v1621
        %1623 = vdwg.mxu0
        %1624 = vmatpush.bf16.msra.mxu0 %v1549
        %1625 = vmatpush.bf16.msra.mxu0 %v1547
        %1626 = vmatpush.bf16.msra.mxu0 %v1545
        %1627 = vmatpush.bf16.msra.mxu0 %v1543
        %1628 = vmatpush.bf16.msra.mxu0 %v1541
        %1629 = vmatpush.bf16.msra.mxu0 %v1539
        %1630 = vmatpush.bf16.msra.mxu0 %v1537
        %1631 = vmatpush.bf16.msra.mxu0 %v1535
        %1632 = vmatmul.bf16.gmra.mxu0 %v1419
        %v1633 = vpop.f32.mrf.mxu0
        %v1634 = vadd.f32 %v1620, %v1633
        %v1635 = vpop.f32.mrf.mxu0
        %v1636 = vadd.f32 %v1622, %v1635
        %1637 = vdwg.mxu0
        %v1638 = vadd.f32 %v776, %v1606
        %v1639 = vadd.f32 %v777, %v1634
        %v1640 = vadd.f32 %v776, %v1608
        %v1641 = vadd.f32 %v777, %v1636
        %v1642 = vld [vmem:[#allocation3] sm:$0xff]
        %v1643 = vld [vmem:[#allocation3 + $0x8] sm:$0xff]
        %v1644 = vld [vmem:[#allocation3 + $0x10] sm:$0x11]
        %s1645 = scalar_lea.vmem [#allocation4], 768
        %v1646 = vld [vmem:[%s1645] sm:$0xff]
        %v1647 = vld [vmem:[%s1645 + $0x8] sm:$0xff]
        %v1648 = vld [vmem:[%s1645 + $0x10] sm:$0xff]
        %v1649 = vld [vmem:[%s1645 + $0x18] sm:$0xff]
        %v1650 = vld [vmem:[%s1645 + $0x20] sm:$0xff]
        %v1651 = vld [vmem:[%s1645 + $0x28] sm:$0xff]
        %v1652 = vld [vmem:[%s1645 + $0x30] sm:$0xff]
        %v1653 = vld [vmem:[%s1645 + $0x38] sm:$0xff]
        %v1654 = vld [vmem:[%s1645 + $0x40] sm:$0xff]
        %v1655 = vld [vmem:[%s1645 + $0x48] sm:$0xff]
        %v1656 = vld [vmem:[%s1645 + $0x50] sm:$0xff]
        %v1657 = vld [vmem:[%s1645 + $0x58] sm:$0xff]
        %v1658 = vld [vmem:[%s1645 + $0x60] sm:$0xff]
        %v1659 = vld [vmem:[%s1645 + $0x68] sm:$0xff]
        %v1660 = vld [vmem:[%s1645 + $0x70] sm:$0xff]
        %v1661 = vld [vmem:[%s1645 + $0x78] sm:$0xff]
        %v1662 = vld [vmem:[%s1645 + $0x80] sm:$0xff]
        %v1663 = vld [vmem:[%s1645 + $0x88] sm:$0xff]
        %v1664 = vld [vmem:[%s1645 + $0x90] sm:$0xff]
        %v1665 = vld [vmem:[%s1645 + $0x98] sm:$0xff]
        %v1666 = vld [vmem:[%s1645 + $0xa0] sm:$0xff]
        %v1667 = vld [vmem:[%s1645 + $0xa8] sm:$0xff]
        %v1668 = vld [vmem:[%s1645 + $0xb0] sm:$0xff]
        %v1669 = vld [vmem:[%s1645 + $0xb8] sm:$0xff]
        %v1670 = vld [vmem:[%s1645 + $0xc0] sm:$0xff]
        %v1671 = vld [vmem:[%s1645 + $0xc8] sm:$0xff]
        %v1672 = vld [vmem:[%s1645 + $0xd0] sm:$0xff]
        %v1673 = vld [vmem:[%s1645 + $0xd8] sm:$0xff]
        %v1674 = vld [vmem:[%s1645 + $0xe0] sm:$0xff]
        %v1675 = vld [vmem:[%s1645 + $0xe8] sm:$0xff]
        %v1676 = vld [vmem:[%s1645 + $0xf0] sm:$0xff]
        %v1677 = vld [vmem:[%s1645 + $0xf8] sm:$0xff]
        %v1681 = vunpack.c.l.b16 %v1642
        %v1682 = vunpack.c.h.b16 %v1642
        %v1683 = vunpack.c.l.b16 %v1643
        %v1684 = vunpack.c.h.b16 %v1643
        %v1685 = vunpack.c.l.b16 %v1644
        %v1686 = vunpack.c.h.b16 %v1644
        %v1687 = vpack.c.b16 %v1683, %v1681
        %v1688 = vpack.c.b16 %v1684, %v1682
        %v1689 = vpack.c.b16 %v1685, %v1685
        %v1690 = vpack.c.b16 %v1686, %v1686
        %v1692 = vshrl.u32 %v1687, 16
        %v1694 = vshll.u32 %v1687, 16
        %v1696 = vrot.slane %v1694, 1
        %v1697 = vor.u32 %v1692, %v1696
        %v1699 = vshll.u32 %v1689, 16
        %v1701 = vrot.slane %v1699, 1
        %v1702 = vsel %vm316, %v1697, %v1701
        %v1704 = vshrl.u32 %v1688, 16
        %v1706 = vshll.u32 %v1688, 16
        %v1708 = vrot.slane %v1706, 1
        %v1709 = vor.u32 %v1704, %v1708
        %v1711 = vshll.u32 %v1690, 16
        %v1713 = vrot.slane %v1711, 1
        %v1714 = vsel %vm316, %v1709, %v1713
        %v1749 = vunpack.c.l.b16 %v1646
        %v1750 = vunpack.c.h.b16 %v1646
        %v1751 = vunpack.c.l.b16 %v1647
        %v1752 = vunpack.c.h.b16 %v1647
        %v1753 = vunpack.c.l.b16 %v1648
        %v1754 = vunpack.c.h.b16 %v1648
        %v1755 = vunpack.c.l.b16 %v1649
        %v1756 = vunpack.c.h.b16 %v1649
        %v1757 = vunpack.c.l.b16 %v1650
        %v1758 = vunpack.c.h.b16 %v1650
        %v1759 = vunpack.c.l.b16 %v1651
        %v1760 = vunpack.c.h.b16 %v1651
        %v1761 = vunpack.c.l.b16 %v1652
        %v1762 = vunpack.c.h.b16 %v1652
        %v1763 = vunpack.c.l.b16 %v1653
        %v1764 = vunpack.c.h.b16 %v1653
        %v1765 = vunpack.c.l.b16 %v1654
        %v1766 = vunpack.c.h.b16 %v1654
        %v1767 = vunpack.c.l.b16 %v1655
        %v1768 = vunpack.c.h.b16 %v1655
        %v1769 = vunpack.c.l.b16 %v1656
        %v1770 = vunpack.c.h.b16 %v1656
        %v1771 = vunpack.c.l.b16 %v1657
        %v1772 = vunpack.c.h.b16 %v1657
        %v1773 = vunpack.c.l.b16 %v1658
        %v1774 = vunpack.c.h.b16 %v1658
        %v1775 = vunpack.c.l.b16 %v1659
        %v1776 = vunpack.c.h.b16 %v1659
        %v1777 = vunpack.c.l.b16 %v1660
        %v1778 = vunpack.c.h.b16 %v1660
        %v1779 = vunpack.c.l.b16 %v1661
        %v1780 = vunpack.c.h.b16 %v1661
        %v1781 = vunpack.c.l.b16 %v1662
        %v1782 = vunpack.c.h.b16 %v1662
        %v1783 = vunpack.c.l.b16 %v1663
        %v1784 = vunpack.c.h.b16 %v1663
        %v1785 = vunpack.c.l.b16 %v1664
        %v1786 = vunpack.c.h.b16 %v1664
        %v1787 = vunpack.c.l.b16 %v1665
        %v1788 = vunpack.c.h.b16 %v1665
        %v1789 = vunpack.c.l.b16 %v1666
        %v1790 = vunpack.c.h.b16 %v1666
        %v1791 = vunpack.c.l.b16 %v1667
        %v1792 = vunpack.c.h.b16 %v1667
        %v1793 = vunpack.c.l.b16 %v1668
        %v1794 = vunpack.c.h.b16 %v1668
        %v1795 = vunpack.c.l.b16 %v1669
        %v1796 = vunpack.c.h.b16 %v1669
        %v1797 = vunpack.c.l.b16 %v1670
        %v1798 = vunpack.c.h.b16 %v1670
        %v1799 = vunpack.c.l.b16 %v1671
        %v1800 = vunpack.c.h.b16 %v1671
        %v1801 = vunpack.c.l.b16 %v1672
        %v1802 = vunpack.c.h.b16 %v1672
        %v1803 = vunpack.c.l.b16 %v1673
        %v1804 = vunpack.c.h.b16 %v1673
        %v1805 = vunpack.c.l.b16 %v1674
        %v1806 = vunpack.c.h.b16 %v1674
        %v1807 = vunpack.c.l.b16 %v1675
        %v1808 = vunpack.c.h.b16 %v1675
        %v1809 = vunpack.c.l.b16 %v1676
        %v1810 = vunpack.c.h.b16 %v1676
        %v1811 = vunpack.c.l.b16 %v1677
        %v1812 = vunpack.c.h.b16 %v1677
        %v1813 = vpack.c.b16 %v1751, %v1749
        %v1814 = vpack.c.b16 %v1752, %v1750
        %v1815 = vpack.c.b16 %v1755, %v1753
        %v1816 = vpack.c.b16 %v1756, %v1754
        %v1817 = vpack.c.b16 %v1759, %v1757
        %v1818 = vpack.c.b16 %v1760, %v1758
        %v1819 = vpack.c.b16 %v1763, %v1761
        %v1820 = vpack.c.b16 %v1764, %v1762
        %v1821 = vpack.c.b16 %v1767, %v1765
        %v1822 = vpack.c.b16 %v1768, %v1766
        %v1823 = vpack.c.b16 %v1771, %v1769
        %v1824 = vpack.c.b16 %v1772, %v1770
        %v1825 = vpack.c.b16 %v1775, %v1773
        %v1826 = vpack.c.b16 %v1776, %v1774
        %v1827 = vpack.c.b16 %v1779, %v1777
        %v1828 = vpack.c.b16 %v1780, %v1778
        %v1829 = vpack.c.b16 %v1783, %v1781
        %v1830 = vpack.c.b16 %v1784, %v1782
        %v1831 = vpack.c.b16 %v1787, %v1785
        %v1832 = vpack.c.b16 %v1788, %v1786
        %v1833 = vpack.c.b16 %v1791, %v1789
        %v1834 = vpack.c.b16 %v1792, %v1790
        %v1835 = vpack.c.b16 %v1795, %v1793
        %v1836 = vpack.c.b16 %v1796, %v1794
        %v1837 = vpack.c.b16 %v1799, %v1797
        %v1838 = vpack.c.b16 %v1800, %v1798
        %v1839 = vpack.c.b16 %v1803, %v1801
        %v1840 = vpack.c.b16 %v1804, %v1802
        %v1841 = vpack.c.b16 %v1807, %v1805
        %v1842 = vpack.c.b16 %v1808, %v1806
        %v1843 = vpack.c.b16 %v1811, %v1809
        %v1844 = vpack.c.b16 %v1812, %v1810
        %1877 = vmatpush.bf16.msra.mxu0 %v1827
        %1878 = vmatpush.bf16.msra.mxu0 %v1825
        %1879 = vmatpush.bf16.msra.mxu0 %v1823
        %1880 = vmatpush.bf16.msra.mxu0 %v1821
        %1881 = vmatpush.bf16.msra.mxu0 %v1819
        %1882 = vmatpush.bf16.msra.mxu0 %v1817
        %1883 = vmatpush.bf16.msra.mxu0 %v1815
        %1884 = vmatpush.bf16.msra.mxu0 %v1813
        %1885 = vmatmul.bf16.gmra.mxu0 %v1702
        %v1886 = vpop.f32.mrf.mxu0
        %v1887 = vadd.f32 0.0, %v1886
        %v1888 = vpop.f32.mrf.mxu0
        %v1889 = vadd.f32 0.0, %v1888
        %1890 = vdwg.mxu0
        %1891 = vmatpush.bf16.msra.mxu0 %v1843
        %1892 = vmatpush.bf16.msra.mxu0 %v1841
        %1893 = vmatpush.bf16.msra.mxu0 %v1839
        %1894 = vmatpush.bf16.msra.mxu0 %v1837
        %1895 = vmatpush.bf16.msra.mxu0 %v1835
        %1896 = vmatpush.bf16.msra.mxu0 %v1833
        %1897 = vmatpush.bf16.msra.mxu0 %v1831
        %1898 = vmatpush.bf16.msra.mxu0 %v1829
        %1899 = vmatmul.bf16.gmra.mxu0 %v1714
        %v1900 = vpop.f32.mrf.mxu0
        %v1901 = vadd.f32 %v1887, %v1900
        %v1902 = vpop.f32.mrf.mxu0
        %v1903 = vadd.f32 %v1889, %v1902
        %1904 = vdwg.mxu0
        %1905 = vmatpush.bf16.msra.mxu0 %v1828
        %1906 = vmatpush.bf16.msra.mxu0 %v1826
        %1907 = vmatpush.bf16.msra.mxu0 %v1824
        %1908 = vmatpush.bf16.msra.mxu0 %v1822
        %1909 = vmatpush.bf16.msra.mxu0 %v1820
        %1910 = vmatpush.bf16.msra.mxu0 %v1818
        %1911 = vmatpush.bf16.msra.mxu0 %v1816
        %1912 = vmatpush.bf16.msra.mxu0 %v1814
        %1913 = vmatmul.bf16.gmra.mxu0 %v1702
        %v1914 = vpop.f32.mrf.mxu0
        %v1915 = vadd.f32 0.0, %v1914
        %v1916 = vpop.f32.mrf.mxu0
        %v1917 = vadd.f32 0.0, %v1916
        %1918 = vdwg.mxu0
        %1919 = vmatpush.bf16.msra.mxu0 %v1844
        %1920 = vmatpush.bf16.msra.mxu0 %v1842
        %1921 = vmatpush.bf16.msra.mxu0 %v1840
        %1922 = vmatpush.bf16.msra.mxu0 %v1838
        %1923 = vmatpush.bf16.msra.mxu0 %v1836
        %1924 = vmatpush.bf16.msra.mxu0 %v1834
        %1925 = vmatpush.bf16.msra.mxu0 %v1832
        %1926 = vmatpush.bf16.msra.mxu0 %v1830
        %1927 = vmatmul.bf16.gmra.mxu0 %v1714
        %v1928 = vpop.f32.mrf.mxu0
        %v1929 = vadd.f32 %v1915, %v1928
        %v1930 = vpop.f32.mrf.mxu0
        %v1931 = vadd.f32 %v1917, %v1930
        %1932 = vdwg.mxu0
        %v1933 = vadd.f32 %v1638, %v1901
        %v1934 = vadd.f32 %v1639, %v1929
        %v1935 = vadd.f32 %v1640, %v1903
        %v1936 = vadd.f32 %v1641, %v1931
        %v1937 = vmax.f32 %v1933, 0.0
        %v1938 = vmax.f32 %v1934, 0.0
        %v1939 = vmax.f32 %v1935, 0.0
        %v1940 = vmax.f32 %v1936, 0.0
        %s1941 = scalar_lea.vmem %s241, 32
        %1942 = vst [vmem:[%s1941] sm:$0xff] %v1937
        %1943 = vst [vmem:[%s1941 + $0x8] sm:$0xff] %v1938
        %1944 = vst [vmem:[%s1941 + $0x10] sm:$0xff] %v1939
        %1945 = vst [vmem:[%s1941 + $0x18] sm:$0xff] %v1940
        %v1946 = vld [vmem:[%s766] sm:$0xff]
        %v1947 = vld [vmem:[%s766 + $0x8] sm:$0xff]
        %v1948 = vld [vmem:[%s766 + $0x10] sm:$0x11]
        %v1949 = vld [vmem:[#allocation4] sm:$0xff]
        %v1950 = vld [vmem:[#allocation4 + $0x8] sm:$0xff]
        %v1951 = vld [vmem:[#allocation4 + $0x10] sm:$0xff]
        %v1952 = vld [vmem:[#allocation4 + $0x18] sm:$0xff]
        %v1953 = vld [vmem:[#allocation4 + $0x20] sm:$0xff]
        %v1954 = vld [vmem:[#allocation4 + $0x28] sm:$0xff]
        %v1955 = vld [vmem:[#allocation4 + $0x30] sm:$0xff]
        %v1956 = vld [vmem:[#allocation4 + $0x38] sm:$0xff]
        %v1957 = vld [vmem:[#allocation4 + $0x40] sm:$0xff]
        %v1958 = vld [vmem:[#allocation4 + $0x48] sm:$0xff]
        %v1959 = vld [vmem:[#allocation4 + $0x50] sm:$0xff]
        %v1960 = vld [vmem:[#allocation4 + $0x58] sm:$0xff]
        %v1961 = vld [vmem:[#allocation4 + $0x60] sm:$0xff]
        %v1962 = vld [vmem:[#allocation4 + $0x68] sm:$0xff]
        %v1963 = vld [vmem:[#allocation4 + $0x70] sm:$0xff]
        %v1964 = vld [vmem:[#allocation4 + $0x78] sm:$0xff]
        %v1965 = vld [vmem:[#allocation4 + $0x80] sm:$0xff]
        %v1966 = vld [vmem:[#allocation4 + $0x88] sm:$0xff]
        %v1967 = vld [vmem:[#allocation4 + $0x90] sm:$0xff]
        %v1968 = vld [vmem:[#allocation4 + $0x98] sm:$0xff]
        %v1969 = vld [vmem:[#allocation4 + $0xa0] sm:$0xff]
        %v1970 = vld [vmem:[#allocation4 + $0xa8] sm:$0xff]
        %v1971 = vld [vmem:[#allocation4 + $0xb0] sm:$0xff]
        %v1972 = vld [vmem:[#allocation4 + $0xb8] sm:$0xff]
        %v1973 = vld [vmem:[#allocation4 + $0xc0] sm:$0xff]
        %v1974 = vld [vmem:[#allocation4 + $0xc8] sm:$0xff]
        %v1975 = vld [vmem:[#allocation4 + $0xd0] sm:$0xff]
        %v1976 = vld [vmem:[#allocation4 + $0xd8] sm:$0xff]
        %v1977 = vld [vmem:[#allocation4 + $0xe0] sm:$0xff]
        %v1978 = vld [vmem:[#allocation4 + $0xe8] sm:$0xff]
        %v1979 = vld [vmem:[#allocation4 + $0xf0] sm:$0xff]
        %v1980 = vld [vmem:[#allocation4 + $0xf8] sm:$0xff]
        %v1984 = vunpack.c.l.b16 %v1946
        %v1985 = vunpack.c.h.b16 %v1946
        %v1986 = vunpack.c.l.b16 %v1947
        %v1987 = vunpack.c.h.b16 %v1947
        %v1988 = vunpack.c.l.b16 %v1948
        %v1989 = vunpack.c.h.b16 %v1948
        %v1990 = vpack.c.b16 %v1986, %v1984
        %v1991 = vpack.c.b16 %v1987, %v1985
        %v1992 = vpack.c.b16 %v1988, %v1988
        %v1993 = vpack.c.b16 %v1989, %v1989
        %v1995 = vshrl.u32 %v1990, 16
        %v1997 = vshll.u32 %v1990, 16
        %v1999 = vrot.slane %v1997, 1
        %v2000 = vor.u32 %v1995, %v1999
        %v2002 = vshll.u32 %v1992, 16
        %v2004 = vrot.slane %v2002, 1
        %v2005 = vsel %vm316, %v2000, %v2004
        %v2007 = vshrl.u32 %v1991, 16
        %v2009 = vshll.u32 %v1991, 16
        %v2011 = vrot.slane %v2009, 1
        %v2012 = vor.u32 %v2007, %v2011
        %v2014 = vshll.u32 %v1993, 16
        %v2016 = vrot.slane %v2014, 1
        %v2017 = vsel %vm316, %v2012, %v2016
        %v2052 = vunpack.c.l.b16 %v1949
        %v2053 = vunpack.c.h.b16 %v1949
        %v2054 = vunpack.c.l.b16 %v1950
        %v2055 = vunpack.c.h.b16 %v1950
        %v2056 = vunpack.c.l.b16 %v1951
        %v2057 = vunpack.c.h.b16 %v1951
        %v2058 = vunpack.c.l.b16 %v1952
        %v2059 = vunpack.c.h.b16 %v1952
        %v2060 = vunpack.c.l.b16 %v1953
        %v2061 = vunpack.c.h.b16 %v1953
        %v2062 = vunpack.c.l.b16 %v1954
        %v2063 = vunpack.c.h.b16 %v1954
        %v2064 = vunpack.c.l.b16 %v1955
        %v2065 = vunpack.c.h.b16 %v1955
        %v2066 = vunpack.c.l.b16 %v1956
        %v2067 = vunpack.c.h.b16 %v1956
        %v2068 = vunpack.c.l.b16 %v1957
        %v2069 = vunpack.c.h.b16 %v1957
        %v2070 = vunpack.c.l.b16 %v1958
        %v2071 = vunpack.c.h.b16 %v1958
        %v2072 = vunpack.c.l.b16 %v1959
        %v2073 = vunpack.c.h.b16 %v1959
        %v2074 = vunpack.c.l.b16 %v1960
        %v2075 = vunpack.c.h.b16 %v1960
        %v2076 = vunpack.c.l.b16 %v1961
        %v2077 = vunpack.c.h.b16 %v1961
        %v2078 = vunpack.c.l.b16 %v1962
        %v2079 = vunpack.c.h.b16 %v1962
        %v2080 = vunpack.c.l.b16 %v1963
        %v2081 = vunpack.c.h.b16 %v1963
        %v2082 = vunpack.c.l.b16 %v1964
        %v2083 = vunpack.c.h.b16 %v1964
        %v2084 = vunpack.c.l.b16 %v1965
        %v2085 = vunpack.c.h.b16 %v1965
        %v2086 = vunpack.c.l.b16 %v1966
        %v2087 = vunpack.c.h.b16 %v1966
        %v2088 = vunpack.c.l.b16 %v1967
        %v2089 = vunpack.c.h.b16 %v1967
        %v2090 = vunpack.c.l.b16 %v1968
        %v2091 = vunpack.c.h.b16 %v1968
        %v2092 = vunpack.c.l.b16 %v1969
        %v2093 = vunpack.c.h.b16 %v1969
        %v2094 = vunpack.c.l.b16 %v1970
        %v2095 = vunpack.c.h.b16 %v1970
        %v2096 = vunpack.c.l.b16 %v1971
        %v2097 = vunpack.c.h.b16 %v1971
        %v2098 = vunpack.c.l.b16 %v1972
        %v2099 = vunpack.c.h.b16 %v1972
        %v2100 = vunpack.c.l.b16 %v1973
        %v2101 = vunpack.c.h.b16 %v1973
        %v2102 = vunpack.c.l.b16 %v1974
        %v2103 = vunpack.c.h.b16 %v1974
        %v2104 = vunpack.c.l.b16 %v1975
        %v2105 = vunpack.c.h.b16 %v1975
        %v2106 = vunpack.c.l.b16 %v1976
        %v2107 = vunpack.c.h.b16 %v1976
        %v2108 = vunpack.c.l.b16 %v1977
        %v2109 = vunpack.c.h.b16 %v1977
        %v2110 = vunpack.c.l.b16 %v1978
        %v2111 = vunpack.c.h.b16 %v1978
        %v2112 = vunpack.c.l.b16 %v1979
        %v2113 = vunpack.c.h.b16 %v1979
        %v2114 = vunpack.c.l.b16 %v1980
        %v2115 = vunpack.c.h.b16 %v1980
        %v2116 = vpack.c.b16 %v2054, %v2052
        %v2117 = vpack.c.b16 %v2055, %v2053
        %v2118 = vpack.c.b16 %v2058, %v2056
        %v2119 = vpack.c.b16 %v2059, %v2057
        %v2120 = vpack.c.b16 %v2062, %v2060
        %v2121 = vpack.c.b16 %v2063, %v2061
        %v2122 = vpack.c.b16 %v2066, %v2064
        %v2123 = vpack.c.b16 %v2067, %v2065
        %v2124 = vpack.c.b16 %v2070, %v2068
        %v2125 = vpack.c.b16 %v2071, %v2069
        %v2126 = vpack.c.b16 %v2074, %v2072
        %v2127 = vpack.c.b16 %v2075, %v2073
        %v2128 = vpack.c.b16 %v2078, %v2076
        %v2129 = vpack.c.b16 %v2079, %v2077
        %v2130 = vpack.c.b16 %v2082, %v2080
        %v2131 = vpack.c.b16 %v2083, %v2081
        %v2132 = vpack.c.b16 %v2086, %v2084
        %v2133 = vpack.c.b16 %v2087, %v2085
        %v2134 = vpack.c.b16 %v2090, %v2088
        %v2135 = vpack.c.b16 %v2091, %v2089
        %v2136 = vpack.c.b16 %v2094, %v2092
        %v2137 = vpack.c.b16 %v2095, %v2093
        %v2138 = vpack.c.b16 %v2098, %v2096
        %v2139 = vpack.c.b16 %v2099, %v2097
        %v2140 = vpack.c.b16 %v2102, %v2100
        %v2141 = vpack.c.b16 %v2103, %v2101
        %v2142 = vpack.c.b16 %v2106, %v2104
        %v2143 = vpack.c.b16 %v2107, %v2105
        %v2144 = vpack.c.b16 %v2110, %v2108
        %v2145 = vpack.c.b16 %v2111, %v2109
        %v2146 = vpack.c.b16 %v2114, %v2112
        %v2147 = vpack.c.b16 %v2115, %v2113
        %2180 = vmatpush.bf16.msra.mxu0 %v2130
        %2181 = vmatpush.bf16.msra.mxu0 %v2128
        %2182 = vmatpush.bf16.msra.mxu0 %v2126
        %2183 = vmatpush.bf16.msra.mxu0 %v2124
        %2184 = vmatpush.bf16.msra.mxu0 %v2122
        %2185 = vmatpush.bf16.msra.mxu0 %v2120
        %2186 = vmatpush.bf16.msra.mxu0 %v2118
        %2187 = vmatpush.bf16.msra.mxu0 %v2116
        %2188 = vmatmul.bf16.gmra.mxu0 %v2005
        %v2189 = vpop.f32.mrf.mxu0
        %v2190 = vadd.f32 0.0, %v2189
        %v2191 = vpop.f32.mrf.mxu0
        %v2192 = vadd.f32 0.0, %v2191
        %2193 = vdwg.mxu0
        %2194 = vmatpush.bf16.msra.mxu0 %v2146
        %2195 = vmatpush.bf16.msra.mxu0 %v2144
        %2196 = vmatpush.bf16.msra.mxu0 %v2142
        %2197 = vmatpush.bf16.msra.mxu0 %v2140
        %2198 = vmatpush.bf16.msra.mxu0 %v2138
        %2199 = vmatpush.bf16.msra.mxu0 %v2136
        %2200 = vmatpush.bf16.msra.mxu0 %v2134
        %2201 = vmatpush.bf16.msra.mxu0 %v2132
        %2202 = vmatmul.bf16.gmra.mxu0 %v2017
        %v2203 = vpop.f32.mrf.mxu0
        %v2204 = vadd.f32 %v2190, %v2203
        %v2205 = vpop.f32.mrf.mxu0
        %v2206 = vadd.f32 %v2192, %v2205
        %2207 = vdwg.mxu0
        %2208 = vmatpush.bf16.msra.mxu0 %v2131
        %2209 = vmatpush.bf16.msra.mxu0 %v2129
        %2210 = vmatpush.bf16.msra.mxu0 %v2127
        %2211 = vmatpush.bf16.msra.mxu0 %v2125
        %2212 = vmatpush.bf16.msra.mxu0 %v2123
        %2213 = vmatpush.bf16.msra.mxu0 %v2121
        %2214 = vmatpush.bf16.msra.mxu0 %v2119
        %2215 = vmatpush.bf16.msra.mxu0 %v2117
        %2216 = vmatmul.bf16.gmra.mxu0 %v2005
        %v2217 = vpop.f32.mrf.mxu0
        %v2218 = vadd.f32 0.0, %v2217
        %v2219 = vpop.f32.mrf.mxu0
        %v2220 = vadd.f32 0.0, %v2219
        %2221 = vdwg.mxu0
        %2222 = vmatpush.bf16.msra.mxu0 %v2147
        %2223 = vmatpush.bf16.msra.mxu0 %v2145
        %2224 = vmatpush.bf16.msra.mxu0 %v2143
        %2225 = vmatpush.bf16.msra.mxu0 %v2141
        %2226 = vmatpush.bf16.msra.mxu0 %v2139
        %2227 = vmatpush.bf16.msra.mxu0 %v2137
        %2228 = vmatpush.bf16.msra.mxu0 %v2135
        %2229 = vmatpush.bf16.msra.mxu0 %v2133
        %2230 = vmatmul.bf16.gmra.mxu0 %v2017
        %v2231 = vpop.f32.mrf.mxu0
        %v2232 = vadd.f32 %v2218, %v2231
        %v2233 = vpop.f32.mrf.mxu0
        %v2234 = vadd.f32 %v2220, %v2233
        %2235 = vdwg.mxu0
        %v2236 = vadd.f32 %v776, %v2204
        %v2237 = vadd.f32 %v777, %v2232
        %v2238 = vadd.f32 %v776, %v2206
        %v2239 = vadd.f32 %v777, %v2234
        %v2240 = vld [vmem:[#allocation3] sm:$0xff]
        %v2241 = vld [vmem:[#allocation3 + $0x8] sm:$0xff]
        %v2242 = vld [vmem:[#allocation3 + $0x10] sm:$0x11]
        %v2243 = vld [vmem:[%s1076] sm:$0xff]
        %v2244 = vld [vmem:[%s1076 + $0x8] sm:$0xff]
        %v2245 = vld [vmem:[%s1076 + $0x10] sm:$0xff]
        %v2246 = vld [vmem:[%s1076 + $0x18] sm:$0xff]
        %v2247 = vld [vmem:[%s1076 + $0x20] sm:$0xff]
        %v2248 = vld [vmem:[%s1076 + $0x28] sm:$0xff]
        %v2249 = vld [vmem:[%s1076 + $0x30] sm:$0xff]
        %v2250 = vld [vmem:[%s1076 + $0x38] sm:$0xff]
        %v2251 = vld [vmem:[%s1076 + $0x40] sm:$0xff]
        %v2252 = vld [vmem:[%s1076 + $0x48] sm:$0xff]
        %v2253 = vld [vmem:[%s1076 + $0x50] sm:$0xff]
        %v2254 = vld [vmem:[%s1076 + $0x58] sm:$0xff]
        %v2255 = vld [vmem:[%s1076 + $0x60] sm:$0xff]
        %v2256 = vld [vmem:[%s1076 + $0x68] sm:$0xff]
        %v2257 = vld [vmem:[%s1076 + $0x70] sm:$0xff]
        %v2258 = vld [vmem:[%s1076 + $0x78] sm:$0xff]
        %v2259 = vld [vmem:[%s1076 + $0x80] sm:$0xff]
        %v2260 = vld [vmem:[%s1076 + $0x88] sm:$0xff]
        %v2261 = vld [vmem:[%s1076 + $0x90] sm:$0xff]
        %v2262 = vld [vmem:[%s1076 + $0x98] sm:$0xff]
        %v2263 = vld [vmem:[%s1076 + $0xa0] sm:$0xff]
        %v2264 = vld [vmem:[%s1076 + $0xa8] sm:$0xff]
        %v2265 = vld [vmem:[%s1076 + $0xb0] sm:$0xff]
        %v2266 = vld [vmem:[%s1076 + $0xb8] sm:$0xff]
        %v2267 = vld [vmem:[%s1076 + $0xc0] sm:$0xff]
        %v2268 = vld [vmem:[%s1076 + $0xc8] sm:$0xff]
        %v2269 = vld [vmem:[%s1076 + $0xd0] sm:$0xff]
        %v2270 = vld [vmem:[%s1076 + $0xd8] sm:$0xff]
        %v2271 = vld [vmem:[%s1076 + $0xe0] sm:$0xff]
        %v2272 = vld [vmem:[%s1076 + $0xe8] sm:$0xff]
        %v2273 = vld [vmem:[%s1076 + $0xf0] sm:$0xff]
        %v2274 = vld [vmem:[%s1076 + $0xf8] sm:$0xff]
        %v2278 = vunpack.c.l.b16 %v2240
        %v2279 = vunpack.c.h.b16 %v2240
        %v2280 = vunpack.c.l.b16 %v2241
        %v2281 = vunpack.c.h.b16 %v2241
        %v2282 = vunpack.c.l.b16 %v2242
        %v2283 = vunpack.c.h.b16 %v2242
        %v2284 = vpack.c.b16 %v2280, %v2278
        %v2285 = vpack.c.b16 %v2281, %v2279
        %v2286 = vpack.c.b16 %v2282, %v2282
        %v2287 = vpack.c.b16 %v2283, %v2283
        %v2289 = vshrl.u32 %v2284, 16
        %v2291 = vshll.u32 %v2284, 16
        %v2293 = vrot.slane %v2291, 1
        %v2294 = vor.u32 %v2289, %v2293
        %v2296 = vshll.u32 %v2286, 16
        %v2298 = vrot.slane %v2296, 1
        %v2299 = vsel %vm316, %v2294, %v2298
        %v2301 = vshrl.u32 %v2285, 16
        %v2303 = vshll.u32 %v2285, 16
        %v2305 = vrot.slane %v2303, 1
        %v2306 = vor.u32 %v2301, %v2305
        %v2308 = vshll.u32 %v2287, 16
        %v2310 = vrot.slane %v2308, 1
        %v2311 = vsel %vm316, %v2306, %v2310
        %v2346 = vunpack.c.l.b16 %v2243
        %v2347 = vunpack.c.h.b16 %v2243
        %v2348 = vunpack.c.l.b16 %v2244
        %v2349 = vunpack.c.h.b16 %v2244
        %v2350 = vunpack.c.l.b16 %v2245
        %v2351 = vunpack.c.h.b16 %v2245
        %v2352 = vunpack.c.l.b16 %v2246
        %v2353 = vunpack.c.h.b16 %v2246
        %v2354 = vunpack.c.l.b16 %v2247
        %v2355 = vunpack.c.h.b16 %v2247
        %v2356 = vunpack.c.l.b16 %v2248
        %v2357 = vunpack.c.h.b16 %v2248
        %v2358 = vunpack.c.l.b16 %v2249
        %v2359 = vunpack.c.h.b16 %v2249
        %v2360 = vunpack.c.l.b16 %v2250
        %v2361 = vunpack.c.h.b16 %v2250
        %v2362 = vunpack.c.l.b16 %v2251
        %v2363 = vunpack.c.h.b16 %v2251
        %v2364 = vunpack.c.l.b16 %v2252
        %v2365 = vunpack.c.h.b16 %v2252
        %v2366 = vunpack.c.l.b16 %v2253
        %v2367 = vunpack.c.h.b16 %v2253
        %v2368 = vunpack.c.l.b16 %v2254
        %v2369 = vunpack.c.h.b16 %v2254
        %v2370 = vunpack.c.l.b16 %v2255
        %v2371 = vunpack.c.h.b16 %v2255
        %v2372 = vunpack.c.l.b16 %v2256
        %v2373 = vunpack.c.h.b16 %v2256
        %v2374 = vunpack.c.l.b16 %v2257
        %v2375 = vunpack.c.h.b16 %v2257
        %v2376 = vunpack.c.l.b16 %v2258
        %v2377 = vunpack.c.h.b16 %v2258
        %v2378 = vunpack.c.l.b16 %v2259
        %v2379 = vunpack.c.h.b16 %v2259
        %v2380 = vunpack.c.l.b16 %v2260
        %v2381 = vunpack.c.h.b16 %v2260
        %v2382 = vunpack.c.l.b16 %v2261
        %v2383 = vunpack.c.h.b16 %v2261
        %v2384 = vunpack.c.l.b16 %v2262
        %v2385 = vunpack.c.h.b16 %v2262
        %v2386 = vunpack.c.l.b16 %v2263
        %v2387 = vunpack.c.h.b16 %v2263
        %v2388 = vunpack.c.l.b16 %v2264
        %v2389 = vunpack.c.h.b16 %v2264
        %v2390 = vunpack.c.l.b16 %v2265
        %v2391 = vunpack.c.h.b16 %v2265
        %v2392 = vunpack.c.l.b16 %v2266
        %v2393 = vunpack.c.h.b16 %v2266
        %v2394 = vunpack.c.l.b16 %v2267
        %v2395 = vunpack.c.h.b16 %v2267
        %v2396 = vunpack.c.l.b16 %v2268
        %v2397 = vunpack.c.h.b16 %v2268
        %v2398 = vunpack.c.l.b16 %v2269
        %v2399 = vunpack.c.h.b16 %v2269
        %v2400 = vunpack.c.l.b16 %v2270
        %v2401 = vunpack.c.h.b16 %v2270
        %v2402 = vunpack.c.l.b16 %v2271
        %v2403 = vunpack.c.h.b16 %v2271
        %v2404 = vunpack.c.l.b16 %v2272
        %v2405 = vunpack.c.h.b16 %v2272
        %v2406 = vunpack.c.l.b16 %v2273
        %v2407 = vunpack.c.h.b16 %v2273
        %v2408 = vunpack.c.l.b16 %v2274
        %v2409 = vunpack.c.h.b16 %v2274
        %v2410 = vpack.c.b16 %v2348, %v2346
        %v2411 = vpack.c.b16 %v2349, %v2347
        %v2412 = vpack.c.b16 %v2352, %v2350
        %v2413 = vpack.c.b16 %v2353, %v2351
        %v2414 = vpack.c.b16 %v2356, %v2354
        %v2415 = vpack.c.b16 %v2357, %v2355
        %v2416 = vpack.c.b16 %v2360, %v2358
        %v2417 = vpack.c.b16 %v2361, %v2359
        %v2418 = vpack.c.b16 %v2364, %v2362
        %v2419 = vpack.c.b16 %v2365, %v2363
        %v2420 = vpack.c.b16 %v2368, %v2366
        %v2421 = vpack.c.b16 %v2369, %v2367
        %v2422 = vpack.c.b16 %v2372, %v2370
        %v2423 = vpack.c.b16 %v2373, %v2371
        %v2424 = vpack.c.b16 %v2376, %v2374
        %v2425 = vpack.c.b16 %v2377, %v2375
        %v2426 = vpack.c.b16 %v2380, %v2378
        %v2427 = vpack.c.b16 %v2381, %v2379
        %v2428 = vpack.c.b16 %v2384, %v2382
        %v2429 = vpack.c.b16 %v2385, %v2383
        %v2430 = vpack.c.b16 %v2388, %v2386
        %v2431 = vpack.c.b16 %v2389, %v2387
        %v2432 = vpack.c.b16 %v2392, %v2390
        %v2433 = vpack.c.b16 %v2393, %v2391
        %v2434 = vpack.c.b16 %v2396, %v2394
        %v2435 = vpack.c.b16 %v2397, %v2395
        %v2436 = vpack.c.b16 %v2400, %v2398
        %v2437 = vpack.c.b16 %v2401, %v2399
        %v2438 = vpack.c.b16 %v2404, %v2402
        %v2439 = vpack.c.b16 %v2405, %v2403
        %v2440 = vpack.c.b16 %v2408, %v2406
        %v2441 = vpack.c.b16 %v2409, %v2407
        %2474 = vmatpush.bf16.msra.mxu0 %v2424
        %2475 = vmatpush.bf16.msra.mxu0 %v2422
        %2476 = vmatpush.bf16.msra.mxu0 %v2420
        %2477 = vmatpush.bf16.msra.mxu0 %v2418
        %2478 = vmatpush.bf16.msra.mxu0 %v2416
        %2479 = vmatpush.bf16.msra.mxu0 %v2414
        %2480 = vmatpush.bf16.msra.mxu0 %v2412
        %2481 = vmatpush.bf16.msra.mxu0 %v2410
        %2482 = vmatmul.bf16.gmra.mxu0 %v2299
        %v2483 = vpop.f32.mrf.mxu0
        %v2484 = vadd.f32 0.0, %v2483
        %v2485 = vpop.f32.mrf.mxu0
        %v2486 = vadd.f32 0.0, %v2485
        %2487 = vdwg.mxu0
        %2488 = vmatpush.bf16.msra.mxu0 %v2440
        %2489 = vmatpush.bf16.msra.mxu0 %v2438
        %2490 = vmatpush.bf16.msra.mxu0 %v2436
        %2491 = vmatpush.bf16.msra.mxu0 %v2434
        %2492 = vmatpush.bf16.msra.mxu0 %v2432
        %2493 = vmatpush.bf16.msra.mxu0 %v2430
        %2494 = vmatpush.bf16.msra.mxu0 %v2428
        %2495 = vmatpush.bf16.msra.mxu0 %v2426
        %2496 = vmatmul.bf16.gmra.mxu0 %v2311
        %v2497 = vpop.f32.mrf.mxu0
        %v2498 = vadd.f32 %v2484, %v2497
        %v2499 = vpop.f32.mrf.mxu0
        %v2500 = vadd.f32 %v2486, %v2499
        %2501 = vdwg.mxu0
        %2502 = vmatpush.bf16.msra.mxu0 %v2425
        %2503 = vmatpush.bf16.msra.mxu0 %v2423
        %2504 = vmatpush.bf16.msra.mxu0 %v2421
        %2505 = vmatpush.bf16.msra.mxu0 %v2419
        %2506 = vmatpush.bf16.msra.mxu0 %v2417
        %2507 = vmatpush.bf16.msra.mxu0 %v2415
        %2508 = vmatpush.bf16.msra.mxu0 %v2413
        %2509 = vmatpush.bf16.msra.mxu0 %v2411
        %2510 = vmatmul.bf16.gmra.mxu0 %v2299
        %v2511 = vpop.f32.mrf.mxu0
        %v2512 = vadd.f32 0.0, %v2511
        %v2513 = vpop.f32.mrf.mxu0
        %v2514 = vadd.f32 0.0, %v2513
        %2515 = vdwg.mxu0
        %2516 = vmatpush.bf16.msra.mxu0 %v2441
        %2517 = vmatpush.bf16.msra.mxu0 %v2439
        %2518 = vmatpush.bf16.msra.mxu0 %v2437
        %2519 = vmatpush.bf16.msra.mxu0 %v2435
        %2520 = vmatpush.bf16.msra.mxu0 %v2433
        %2521 = vmatpush.bf16.msra.mxu0 %v2431
        %2522 = vmatpush.bf16.msra.mxu0 %v2429
        %2523 = vmatpush.bf16.msra.mxu0 %v2427
        %2524 = vmatmul.bf16.gmra.mxu0 %v2311
        %v2525 = vpop.f32.mrf.mxu0
        %v2526 = vadd.f32 %v2512, %v2525
        %v2527 = vpop.f32.mrf.mxu0
        %v2528 = vadd.f32 %v2514, %v2527
        %2529 = vdwg.mxu0
        %v2530 = vadd.f32 %v2236, %v2498
        %v2531 = vadd.f32 %v2237, %v2526
        %v2532 = vadd.f32 %v2238, %v2500
        %v2533 = vadd.f32 %v2239, %v2528
        %v2534 = vmax.f32 %v2530, 0.0
        %v2535 = vmax.f32 %v2531, 0.0
        %v2536 = vmax.f32 %v2532, 0.0
        %v2537 = vmax.f32 %v2533, 0.0
        %s2538 = scalar_lea.vmem %s241, 64
        %2539 = vst [vmem:[%s2538] sm:$0xff] %v2534
        %2540 = vst [vmem:[%s2538 + $0x8] sm:$0xff] %v2535
        %2541 = vst [vmem:[%s2538 + $0x10] sm:$0xff] %v2536
        %2542 = vst [vmem:[%s2538 + $0x18] sm:$0xff] %v2537
        %v2543 = vld [vmem:[#allocation3] sm:$0xee]
        %v2544 = vld [vmem:[#allocation3 + $0x8] sm:$0xff]
        %v2545 = vld [vmem:[#allocation3 + $0x10] sm:$0x11]
        %v2546 = vld [vmem:[%s1350] sm:$0xff]
        %v2547 = vld [vmem:[%s1350 + $0x8] sm:$0xff]
        %v2548 = vld [vmem:[%s1350 + $0x10] sm:$0xff]
        %v2549 = vld [vmem:[%s1350 + $0x18] sm:$0xff]
        %v2550 = vld [vmem:[%s1350 + $0x20] sm:$0xff]
        %v2551 = vld [vmem:[%s1350 + $0x28] sm:$0xff]
        %v2552 = vld [vmem:[%s1350 + $0x30] sm:$0xff]
        %v2553 = vld [vmem:[%s1350 + $0x38] sm:$0xff]
        %v2554 = vld [vmem:[%s1350 + $0x40] sm:$0xff]
        %v2555 = vld [vmem:[%s1350 + $0x48] sm:$0xff]
        %v2556 = vld [vmem:[%s1350 + $0x50] sm:$0xff]
        %v2557 = vld [vmem:[%s1350 + $0x58] sm:$0xff]
        %v2558 = vld [vmem:[%s1350 + $0x60] sm:$0xff]
        %v2559 = vld [vmem:[%s1350 + $0x68] sm:$0xff]
        %v2560 = vld [vmem:[%s1350 + $0x70] sm:$0xff]
        %v2561 = vld [vmem:[%s1350 + $0x78] sm:$0xff]
        %v2562 = vld [vmem:[%s1350 + $0x80] sm:$0xff]
        %v2563 = vld [vmem:[%s1350 + $0x88] sm:$0xff]
        %v2564 = vld [vmem:[%s1350 + $0x90] sm:$0xff]
        %v2565 = vld [vmem:[%s1350 + $0x98] sm:$0xff]
        %v2566 = vld [vmem:[%s1350 + $0xa0] sm:$0xff]
        %v2567 = vld [vmem:[%s1350 + $0xa8] sm:$0xff]
        %v2568 = vld [vmem:[%s1350 + $0xb0] sm:$0xff]
        %v2569 = vld [vmem:[%s1350 + $0xb8] sm:$0xff]
        %v2570 = vld [vmem:[%s1350 + $0xc0] sm:$0xff]
        %v2571 = vld [vmem:[%s1350 + $0xc8] sm:$0xff]
        %v2572 = vld [vmem:[%s1350 + $0xd0] sm:$0xff]
        %v2573 = vld [vmem:[%s1350 + $0xd8] sm:$0xff]
        %v2574 = vld [vmem:[%s1350 + $0xe0] sm:$0xff]
        %v2575 = vld [vmem:[%s1350 + $0xe8] sm:$0xff]
        %v2576 = vld [vmem:[%s1350 + $0xf0] sm:$0xff]
        %v2577 = vld [vmem:[%s1350 + $0xf8] sm:$0xff]
        %v2581 = vunpack.c.l.b16 %v2543
        %v2582 = vunpack.c.h.b16 %v2543
        %v2583 = vunpack.c.l.b16 %v2544
        %v2584 = vunpack.c.h.b16 %v2544
        %v2585 = vunpack.c.l.b16 %v2545
        %v2586 = vunpack.c.h.b16 %v2545
        %v2587 = vpack.c.b16 %v2583, %v2581
        %v2588 = vpack.c.b16 %v2584, %v2582
        %v2589 = vpack.c.b16 %v2585, %v2585
        %v2590 = vpack.c.b16 %v2586, %v2586
        %v2591 = vrot.slane %v2587, 1
        %v2592 = vrot.slane %v2589, 1
        %v2593 = vsel %vm561, %v2591, %v2592
        %v2594 = vrot.slane %v2588, 1
        %v2595 = vrot.slane %v2590, 1
        %v2596 = vsel %vm561, %v2594, %v2595
        %v2631 = vunpack.c.l.b16 %v2546
        %v2632 = vunpack.c.h.b16 %v2546
        %v2633 = vunpack.c.l.b16 %v2547
        %v2634 = vunpack.c.h.b16 %v2547
        %v2635 = vunpack.c.l.b16 %v2548
        %v2636 = vunpack.c.h.b16 %v2548
        %v2637 = vunpack.c.l.b16 %v2549
        %v2638 = vunpack.c.h.b16 %v2549
        %v2639 = vunpack.c.l.b16 %v2550
        %v2640 = vunpack.c.h.b16 %v2550
        %v2641 = vunpack.c.l.b16 %v2551
        %v2642 = vunpack.c.h.b16 %v2551
        %v2643 = vunpack.c.l.b16 %v2552
        %v2644 = vunpack.c.h.b16 %v2552
        %v2645 = vunpack.c.l.b16 %v2553
        %v2646 = vunpack.c.h.b16 %v2553
        %v2647 = vunpack.c.l.b16 %v2554
        %v2648 = vunpack.c.h.b16 %v2554
        %v2649 = vunpack.c.l.b16 %v2555
        %v2650 = vunpack.c.h.b16 %v2555
        %v2651 = vunpack.c.l.b16 %v2556
        %v2652 = vunpack.c.h.b16 %v2556
        %v2653 = vunpack.c.l.b16 %v2557
        %v2654 = vunpack.c.h.b16 %v2557
        %v2655 = vunpack.c.l.b16 %v2558
        %v2656 = vunpack.c.h.b16 %v2558
        %v2657 = vunpack.c.l.b16 %v2559
        %v2658 = vunpack.c.h.b16 %v2559
        %v2659 = vunpack.c.l.b16 %v2560
        %v2660 = vunpack.c.h.b16 %v2560
        %v2661 = vunpack.c.l.b16 %v2561
        %v2662 = vunpack.c.h.b16 %v2561
        %v2663 = vunpack.c.l.b16 %v2562
        %v2664 = vunpack.c.h.b16 %v2562
        %v2665 = vunpack.c.l.b16 %v2563
        %v2666 = vunpack.c.h.b16 %v2563
        %v2667 = vunpack.c.l.b16 %v2564
        %v2668 = vunpack.c.h.b16 %v2564
        %v2669 = vunpack.c.l.b16 %v2565
        %v2670 = vunpack.c.h.b16 %v2565
        %v2671 = vunpack.c.l.b16 %v2566
        %v2672 = vunpack.c.h.b16 %v2566
        %v2673 = vunpack.c.l.b16 %v2567
        %v2674 = vunpack.c.h.b16 %v2567
        %v2675 = vunpack.c.l.b16 %v2568
        %v2676 = vunpack.c.h.b16 %v2568
        %v2677 = vunpack.c.l.b16 %v2569
        %v2678 = vunpack.c.h.b16 %v2569
        %v2679 = vunpack.c.l.b16 %v2570
        %v2680 = vunpack.c.h.b16 %v2570
        %v2681 = vunpack.c.l.b16 %v2571
        %v2682 = vunpack.c.h.b16 %v2571
        %v2683 = vunpack.c.l.b16 %v2572
        %v2684 = vunpack.c.h.b16 %v2572
        %v2685 = vunpack.c.l.b16 %v2573
        %v2686 = vunpack.c.h.b16 %v2573
        %v2687 = vunpack.c.l.b16 %v2574
        %v2688 = vunpack.c.h.b16 %v2574
        %v2689 = vunpack.c.l.b16 %v2575
        %v2690 = vunpack.c.h.b16 %v2575
        %v2691 = vunpack.c.l.b16 %v2576
        %v2692 = vunpack.c.h.b16 %v2576
        %v2693 = vunpack.c.l.b16 %v2577
        %v2694 = vunpack.c.h.b16 %v2577
        %v2695 = vpack.c.b16 %v2633, %v2631
        %v2696 = vpack.c.b16 %v2634, %v2632
        %v2697 = vpack.c.b16 %v2637, %v2635
        %v2698 = vpack.c.b16 %v2638, %v2636
        %v2699 = vpack.c.b16 %v2641, %v2639
        %v2700 = vpack.c.b16 %v2642, %v2640
        %v2701 = vpack.c.b16 %v2645, %v2643
        %v2702 = vpack.c.b16 %v2646, %v2644
        %v2703 = vpack.c.b16 %v2649, %v2647
        %v2704 = vpack.c.b16 %v2650, %v2648
        %v2705 = vpack.c.b16 %v2653, %v2651
        %v2706 = vpack.c.b16 %v2654, %v2652
        %v2707 = vpack.c.b16 %v2657, %v2655
        %v2708 = vpack.c.b16 %v2658, %v2656
        %v2709 = vpack.c.b16 %v2661, %v2659
        %v2710 = vpack.c.b16 %v2662, %v2660
        %v2711 = vpack.c.b16 %v2665, %v2663
        %v2712 = vpack.c.b16 %v2666, %v2664
        %v2713 = vpack.c.b16 %v2669, %v2667
        %v2714 = vpack.c.b16 %v2670, %v2668
        %v2715 = vpack.c.b16 %v2673, %v2671
        %v2716 = vpack.c.b16 %v2674, %v2672
        %v2717 = vpack.c.b16 %v2677, %v2675
        %v2718 = vpack.c.b16 %v2678, %v2676
        %v2719 = vpack.c.b16 %v2681, %v2679
        %v2720 = vpack.c.b16 %v2682, %v2680
        %v2721 = vpack.c.b16 %v2685, %v2683
        %v2722 = vpack.c.b16 %v2686, %v2684
        %v2723 = vpack.c.b16 %v2689, %v2687
        %v2724 = vpack.c.b16 %v2690, %v2688
        %v2725 = vpack.c.b16 %v2693, %v2691
        %v2726 = vpack.c.b16 %v2694, %v2692
        %2759 = vmatpush.bf16.msra.mxu0 %v2709
        %2760 = vmatpush.bf16.msra.mxu0 %v2707
        %2761 = vmatpush.bf16.msra.mxu0 %v2705
        %2762 = vmatpush.bf16.msra.mxu0 %v2703
        %2763 = vmatpush.bf16.msra.mxu0 %v2701
        %2764 = vmatpush.bf16.msra.mxu0 %v2699
        %2765 = vmatpush.bf16.msra.mxu0 %v2697
        %2766 = vmatpush.bf16.msra.mxu0 %v2695
        %2767 = vmatmul.bf16.gmra.mxu0 %v2593
        %v2768 = vpop.f32.mrf.mxu0
        %v2769 = vadd.f32 0.0, %v2768
        %v2770 = vpop.f32.mrf.mxu0
        %v2771 = vadd.f32 0.0, %v2770
        %2772 = vdwg.mxu0
        %2773 = vmatpush.bf16.msra.mxu0 %v2725
        %2774 = vmatpush.bf16.msra.mxu0 %v2723
        %2775 = vmatpush.bf16.msra.mxu0 %v2721
        %2776 = vmatpush.bf16.msra.mxu0 %v2719
        %2777 = vmatpush.bf16.msra.mxu0 %v2717
        %2778 = vmatpush.bf16.msra.mxu0 %v2715
        %2779 = vmatpush.bf16.msra.mxu0 %v2713
        %2780 = vmatpush.bf16.msra.mxu0 %v2711
        %2781 = vmatmul.bf16.gmra.mxu0 %v2596
        %v2782 = vpop.f32.mrf.mxu0
        %v2783 = vadd.f32 %v2769, %v2782
        %v2784 = vpop.f32.mrf.mxu0
        %v2785 = vadd.f32 %v2771, %v2784
        %2786 = vdwg.mxu0
        %2787 = vmatpush.bf16.msra.mxu0 %v2710
        %2788 = vmatpush.bf16.msra.mxu0 %v2708
        %2789 = vmatpush.bf16.msra.mxu0 %v2706
        %2790 = vmatpush.bf16.msra.mxu0 %v2704
        %2791 = vmatpush.bf16.msra.mxu0 %v2702
        %2792 = vmatpush.bf16.msra.mxu0 %v2700
        %2793 = vmatpush.bf16.msra.mxu0 %v2698
        %2794 = vmatpush.bf16.msra.mxu0 %v2696
        %2795 = vmatmul.bf16.gmra.mxu0 %v2593
        %v2796 = vpop.f32.mrf.mxu0
        %v2797 = vadd.f32 0.0, %v2796
        %v2798 = vpop.f32.mrf.mxu0
        %v2799 = vadd.f32 0.0, %v2798
        %2800 = vdwg.mxu0
        %2801 = vmatpush.bf16.msra.mxu0 %v2726
        %2802 = vmatpush.bf16.msra.mxu0 %v2724
        %2803 = vmatpush.bf16.msra.mxu0 %v2722
        %2804 = vmatpush.bf16.msra.mxu0 %v2720
        %2805 = vmatpush.bf16.msra.mxu0 %v2718
        %2806 = vmatpush.bf16.msra.mxu0 %v2716
        %2807 = vmatpush.bf16.msra.mxu0 %v2714
        %2808 = vmatpush.bf16.msra.mxu0 %v2712
        %2809 = vmatmul.bf16.gmra.mxu0 %v2596
        %v2810 = vpop.f32.mrf.mxu0
        %v2811 = vadd.f32 %v2797, %v2810
        %v2812 = vpop.f32.mrf.mxu0
        %v2813 = vadd.f32 %v2799, %v2812
        %2814 = vdwg.mxu0
        %v2815 = vadd.f32 %v776, %v2783
        %v2816 = vadd.f32 %v777, %v2811
        %v2817 = vadd.f32 %v776, %v2785
        %v2818 = vadd.f32 %v777, %v2813
        %v2819 = vld [vmem:[%s766] sm:$0xff]
        %v2820 = vld [vmem:[%s766 + $0x8] sm:$0xff]
        %v2821 = vld [vmem:[%s766 + $0x10] sm:$0x11]
        %v2822 = vld [vmem:[%s1645] sm:$0xff]
        %v2823 = vld [vmem:[%s1645 + $0x8] sm:$0xff]
        %v2824 = vld [vmem:[%s1645 + $0x10] sm:$0xff]
        %v2825 = vld [vmem:[%s1645 + $0x18] sm:$0xff]
        %v2826 = vld [vmem:[%s1645 + $0x20] sm:$0xff]
        %v2827 = vld [vmem:[%s1645 + $0x28] sm:$0xff]
        %v2828 = vld [vmem:[%s1645 + $0x30] sm:$0xff]
        %v2829 = vld [vmem:[%s1645 + $0x38] sm:$0xff]
        %v2830 = vld [vmem:[%s1645 + $0x40] sm:$0xff]
        %v2831 = vld [vmem:[%s1645 + $0x48] sm:$0xff]
        %v2832 = vld [vmem:[%s1645 + $0x50] sm:$0xff]
        %v2833 = vld [vmem:[%s1645 + $0x58] sm:$0xff]
        %v2834 = vld [vmem:[%s1645 + $0x60] sm:$0xff]
        %v2835 = vld [vmem:[%s1645 + $0x68] sm:$0xff]
        %v2836 = vld [vmem:[%s1645 + $0x70] sm:$0xff]
        %v2837 = vld [vmem:[%s1645 + $0x78] sm:$0xff]
        %v2838 = vld [vmem:[%s1645 + $0x80] sm:$0xff]
        %v2839 = vld [vmem:[%s1645 + $0x88] sm:$0xff]
        %v2840 = vld [vmem:[%s1645 + $0x90] sm:$0xff]
        %v2841 = vld [vmem:[%s1645 + $0x98] sm:$0xff]
        %v2842 = vld [vmem:[%s1645 + $0xa0] sm:$0xff]
        %v2843 = vld [vmem:[%s1645 + $0xa8] sm:$0xff]
        %v2844 = vld [vmem:[%s1645 + $0xb0] sm:$0xff]
        %v2845 = vld [vmem:[%s1645 + $0xb8] sm:$0xff]
        %v2846 = vld [vmem:[%s1645 + $0xc0] sm:$0xff]
        %v2847 = vld [vmem:[%s1645 + $0xc8] sm:$0xff]
        %v2848 = vld [vmem:[%s1645 + $0xd0] sm:$0xff]
        %v2849 = vld [vmem:[%s1645 + $0xd8] sm:$0xff]
        %v2850 = vld [vmem:[%s1645 + $0xe0] sm:$0xff]
        %v2851 = vld [vmem:[%s1645 + $0xe8] sm:$0xff]
        %v2852 = vld [vmem:[%s1645 + $0xf0] sm:$0xff]
        %v2853 = vld [vmem:[%s1645 + $0xf8] sm:$0xff]
        %v2857 = vunpack.c.l.b16 %v2819
        %v2858 = vunpack.c.h.b16 %v2819
        %v2859 = vunpack.c.l.b16 %v2820
        %v2860 = vunpack.c.h.b16 %v2820
        %v2861 = vunpack.c.l.b16 %v2821
        %v2862 = vunpack.c.h.b16 %v2821
        %v2863 = vpack.c.b16 %v2859, %v2857
        %v2864 = vpack.c.b16 %v2860, %v2858
        %v2865 = vpack.c.b16 %v2861, %v2861
        %v2866 = vpack.c.b16 %v2862, %v2862
        %v2868 = vshrl.u32 %v2863, 16
        %v2870 = vshll.u32 %v2863, 16
        %v2872 = vrot.slane %v2870, 1
        %v2873 = vor.u32 %v2868, %v2872
        %v2875 = vshll.u32 %v2865, 16
        %v2877 = vrot.slane %v2875, 1
        %v2878 = vsel %vm316, %v2873, %v2877
        %v2880 = vshrl.u32 %v2864, 16
        %v2882 = vshll.u32 %v2864, 16
        %v2884 = vrot.slane %v2882, 1
        %v2885 = vor.u32 %v2880, %v2884
        %v2887 = vshll.u32 %v2866, 16
        %v2889 = vrot.slane %v2887, 1
        %v2890 = vsel %vm316, %v2885, %v2889
        %v2925 = vunpack.c.l.b16 %v2822
        %v2926 = vunpack.c.h.b16 %v2822
        %v2927 = vunpack.c.l.b16 %v2823
        %v2928 = vunpack.c.h.b16 %v2823
        %v2929 = vunpack.c.l.b16 %v2824
        %v2930 = vunpack.c.h.b16 %v2824
        %v2931 = vunpack.c.l.b16 %v2825
        %v2932 = vunpack.c.h.b16 %v2825
        %v2933 = vunpack.c.l.b16 %v2826
        %v2934 = vunpack.c.h.b16 %v2826
        %v2935 = vunpack.c.l.b16 %v2827
        %v2936 = vunpack.c.h.b16 %v2827
        %v2937 = vunpack.c.l.b16 %v2828
        %v2938 = vunpack.c.h.b16 %v2828
        %v2939 = vunpack.c.l.b16 %v2829
        %v2940 = vunpack.c.h.b16 %v2829
        %v2941 = vunpack.c.l.b16 %v2830
        %v2942 = vunpack.c.h.b16 %v2830
        %v2943 = vunpack.c.l.b16 %v2831
        %v2944 = vunpack.c.h.b16 %v2831
        %v2945 = vunpack.c.l.b16 %v2832
        %v2946 = vunpack.c.h.b16 %v2832
        %v2947 = vunpack.c.l.b16 %v2833
        %v2948 = vunpack.c.h.b16 %v2833
        %v2949 = vunpack.c.l.b16 %v2834
        %v2950 = vunpack.c.h.b16 %v2834
        %v2951 = vunpack.c.l.b16 %v2835
        %v2952 = vunpack.c.h.b16 %v2835
        %v2953 = vunpack.c.l.b16 %v2836
        %v2954 = vunpack.c.h.b16 %v2836
        %v2955 = vunpack.c.l.b16 %v2837
        %v2956 = vunpack.c.h.b16 %v2837
        %v2957 = vunpack.c.l.b16 %v2838
        %v2958 = vunpack.c.h.b16 %v2838
        %v2959 = vunpack.c.l.b16 %v2839
        %v2960 = vunpack.c.h.b16 %v2839
        %v2961 = vunpack.c.l.b16 %v2840
        %v2962 = vunpack.c.h.b16 %v2840
        %v2963 = vunpack.c.l.b16 %v2841
        %v2964 = vunpack.c.h.b16 %v2841
        %v2965 = vunpack.c.l.b16 %v2842
        %v2966 = vunpack.c.h.b16 %v2842
        %v2967 = vunpack.c.l.b16 %v2843
        %v2968 = vunpack.c.h.b16 %v2843
        %v2969 = vunpack.c.l.b16 %v2844
        %v2970 = vunpack.c.h.b16 %v2844
        %v2971 = vunpack.c.l.b16 %v2845
        %v2972 = vunpack.c.h.b16 %v2845
        %v2973 = vunpack.c.l.b16 %v2846
        %v2974 = vunpack.c.h.b16 %v2846
        %v2975 = vunpack.c.l.b16 %v2847
        %v2976 = vunpack.c.h.b16 %v2847
        %v2977 = vunpack.c.l.b16 %v2848
        %v2978 = vunpack.c.h.b16 %v2848
        %v2979 = vunpack.c.l.b16 %v2849
        %v2980 = vunpack.c.h.b16 %v2849
        %v2981 = vunpack.c.l.b16 %v2850
        %v2982 = vunpack.c.h.b16 %v2850
        %v2983 = vunpack.c.l.b16 %v2851
        %v2984 = vunpack.c.h.b16 %v2851
        %v2985 = vunpack.c.l.b16 %v2852
        %v2986 = vunpack.c.h.b16 %v2852
        %v2987 = vunpack.c.l.b16 %v2853
        %v2988 = vunpack.c.h.b16 %v2853
        %v2989 = vpack.c.b16 %v2927, %v2925
        %v2990 = vpack.c.b16 %v2928, %v2926
        %v2991 = vpack.c.b16 %v2931, %v2929
        %v2992 = vpack.c.b16 %v2932, %v2930
        %v2993 = vpack.c.b16 %v2935, %v2933
        %v2994 = vpack.c.b16 %v2936, %v2934
        %v2995 = vpack.c.b16 %v2939, %v2937
        %v2996 = vpack.c.b16 %v2940, %v2938
        %v2997 = vpack.c.b16 %v2943, %v2941
        %v2998 = vpack.c.b16 %v2944, %v2942
        %v2999 = vpack.c.b16 %v2947, %v2945
        %v3000 = vpack.c.b16 %v2948, %v2946
        %v3001 = vpack.c.b16 %v2951, %v2949
        %v3002 = vpack.c.b16 %v2952, %v2950
        %v3003 = vpack.c.b16 %v2955, %v2953
        %v3004 = vpack.c.b16 %v2956, %v2954
        %v3005 = vpack.c.b16 %v2959, %v2957
        %v3006 = vpack.c.b16 %v2960, %v2958
        %v3007 = vpack.c.b16 %v2963, %v2961
        %v3008 = vpack.c.b16 %v2964, %v2962
        %v3009 = vpack.c.b16 %v2967, %v2965
        %v3010 = vpack.c.b16 %v2968, %v2966
        %v3011 = vpack.c.b16 %v2971, %v2969
        %v3012 = vpack.c.b16 %v2972, %v2970
        %v3013 = vpack.c.b16 %v2975, %v2973
        %v3014 = vpack.c.b16 %v2976, %v2974
        %v3015 = vpack.c.b16 %v2979, %v2977
        %v3016 = vpack.c.b16 %v2980, %v2978
        %v3017 = vpack.c.b16 %v2983, %v2981
        %v3018 = vpack.c.b16 %v2984, %v2982
        %v3019 = vpack.c.b16 %v2987, %v2985
        %v3020 = vpack.c.b16 %v2988, %v2986
        %3053 = vmatpush.bf16.msra.mxu0 %v3003
        %3054 = vmatpush.bf16.msra.mxu0 %v3001
        %3055 = vmatpush.bf16.msra.mxu0 %v2999
        %3056 = vmatpush.bf16.msra.mxu0 %v2997
        %3057 = vmatpush.bf16.msra.mxu0 %v2995
        %3058 = vmatpush.bf16.msra.mxu0 %v2993
        %3059 = vmatpush.bf16.msra.mxu0 %v2991
        %3060 = vmatpush.bf16.msra.mxu0 %v2989
        %3061 = vmatmul.bf16.gmra.mxu0 %v2878
        %v3062 = vpop.f32.mrf.mxu0
        %v3063 = vadd.f32 0.0, %v3062
        %v3064 = vpop.f32.mrf.mxu0
        %v3065 = vadd.f32 0.0, %v3064
        %3066 = vdwg.mxu0
        %3067 = vmatpush.bf16.msra.mxu0 %v3019
        %3068 = vmatpush.bf16.msra.mxu0 %v3017
        %3069 = vmatpush.bf16.msra.mxu0 %v3015
        %3070 = vmatpush.bf16.msra.mxu0 %v3013
        %3071 = vmatpush.bf16.msra.mxu0 %v3011
        %3072 = vmatpush.bf16.msra.mxu0 %v3009
        %3073 = vmatpush.bf16.msra.mxu0 %v3007
        %3074 = vmatpush.bf16.msra.mxu0 %v3005
        %3075 = vmatmul.bf16.gmra.mxu0 %v2890
        %v3076 = vpop.f32.mrf.mxu0
        %v3077 = vadd.f32 %v3063, %v3076
        %v3078 = vpop.f32.mrf.mxu0
        %v3079 = vadd.f32 %v3065, %v3078
        %3080 = vdwg.mxu0
        %3081 = vmatpush.bf16.msra.mxu0 %v3004
        %3082 = vmatpush.bf16.msra.mxu0 %v3002
        %3083 = vmatpush.bf16.msra.mxu0 %v3000
        %3084 = vmatpush.bf16.msra.mxu0 %v2998
        %3085 = vmatpush.bf16.msra.mxu0 %v2996
        %3086 = vmatpush.bf16.msra.mxu0 %v2994
        %3087 = vmatpush.bf16.msra.mxu0 %v2992
        %3088 = vmatpush.bf16.msra.mxu0 %v2990
        %3089 = vmatmul.bf16.gmra.mxu0 %v2878
        %v3090 = vpop.f32.mrf.mxu0
        %v3091 = vadd.f32 0.0, %v3090
        %v3092 = vpop.f32.mrf.mxu0
        %v3093 = vadd.f32 0.0, %v3092
        %3094 = vdwg.mxu0
        %3095 = vmatpush.bf16.msra.mxu0 %v3020
        %3096 = vmatpush.bf16.msra.mxu0 %v3018
        %3097 = vmatpush.bf16.msra.mxu0 %v3016
        %3098 = vmatpush.bf16.msra.mxu0 %v3014
        %3099 = vmatpush.bf16.msra.mxu0 %v3012
        %3100 = vmatpush.bf16.msra.mxu0 %v3010
        %3101 = vmatpush.bf16.msra.mxu0 %v3008
        %3102 = vmatpush.bf16.msra.mxu0 %v3006
        %3103 = vmatmul.bf16.gmra.mxu0 %v2890
        %v3104 = vpop.f32.mrf.mxu0
        %v3105 = vadd.f32 %v3091, %v3104
        %v3106 = vpop.f32.mrf.mxu0
        %v3107 = vadd.f32 %v3093, %v3106
        %3108 = vdwg.mxu0
        %v3109 = vadd.f32 %v2815, %v3077
        %v3110 = vadd.f32 %v2816, %v3105
        %v3111 = vadd.f32 %v2817, %v3079
        %v3112 = vadd.f32 %v2818, %v3107
        %v3113 = vmax.f32 %v3109, 0.0
        %v3114 = vmax.f32 %v3110, 0.0
        %v3115 = vmax.f32 %v3111, 0.0
        %v3116 = vmax.f32 %v3112, 0.0
        %s3117 = scalar_lea.vmem %s241, 96
        %3118 = vst [vmem:[%s3117] sm:$0xff] %v3113
        %3119 = vst [vmem:[%s3117 + $0x8] sm:$0xff] %v3114
        %3120 = vst [vmem:[%s3117 + $0x10] sm:$0xff] %v3115
        %3121 = vst [vmem:[%s3117 + $0x18] sm:$0xff] %v3116
        %p3122 = scmp.lt.s32.totalorder %s17, 1
        %s3123 = scalar_select %p3122, %s17, 1
        %s3124 = smul.addr %s3123, 16
        %s3125 = smul.addr %s3124, 8
        %s3126 = scalar_lea.vmem %s5, %s3125
        // Predicated region
        $region45: #{conv_transpose_neural_network.1} parent=39 // pred_check
          %p3127 = pneg %p145
        $region46: #{conv_transpose_neural_network.1} parent=39 // pred_check_branch
          %3129 = sbr.rel (%p3127) target = $region48
        $region47: #{conv_transpose_neural_network.1} parent=39 // pred_region
          _
        $region48: #{conv_transpose_neural_network.1} parent=39 // pred_fallthru
          _
      $region40: #{conv_transpose_neural_network.1} parent=5 // pred_fallthru
        _
      %p3130 = scmp.le.s32.totalorder 2, %s12
      // Predicated region
      $region49: #{conv_transpose_neural_network.1} parent=5 // pred_check
        %p3131 = pneg %p3130
      $region50: #{conv_transpose_neural_network.1} parent=5 // pred_check_branch
        %3133 = sbr.rel (%p3131) target = $region52
      $region51: #{conv_transpose_neural_network.1} parent=5 // pred_region
        %s3134 = ssub.s32 %s12, 2
        // Predicated region
        $region53: #{conv_transpose_neural_network.1} parent=51 // pred_check
          %p3135 = pneg %p151
        $region54: #{conv_transpose_neural_network.1} parent=51 // pred_check_branch
          %3137 = sbr.rel (%p3135) target = $region56
        $region55: #{conv_transpose_neural_network.1} parent=51 // pred_region
          %p3138 = scmp.lt.s32.totalorder %s18, 1
          %s3139 = scalar_select %p3138, %s18, 1
          %s3140 = smul.addr %s3139, 16
          %s3141 = smul.addr %s3140, 8
          %s3142 = scalar_lea.vmem %s5, %s3141
        $region56: #{conv_transpose_neural_network.1} parent=51 // pred_fallthru
          _
      $region52: #{conv_transpose_neural_network.1} parent=5 // pred_fallthru
        _
    $region6: #{conv_transpose_neural_network.1} parent=1 // loop_footer
      %s16 = sadd.s32 1, %s12
    $region7: #{conv_transpose_neural_network.1} parent=1 // loop_footer_branch
      %11 = sbr.rel target = $region3
    $region8: #{conv_transpose_neural_network.1} parent=1 // loop_exit
      _
    %3143 = vsyncpa [#allocation5], 1
    %s3144 = scalar_lea.sflag [#allocation5], 1
    %3145 = vsyncpa %s3144, 1

</llo_original>
